<compile_context>
chip_gen: v7x
topology: tpu7x:2x2x1
jax: 0.10.0
libtpu: 0.0.40
codegen_flags: <defaults>
</compile_context>

<pallas_src>
import functools

import jax
import jax.numpy as jnp
from jax.experimental import pallas as pl
from jax.experimental.pallas import tpu as pltpu


def _make_cnn_window_kernel(K, H, W, C, P, GB):
    """K: conv size, (H, W): image, C: hidden channels, P: images packed on
    lanes, GB: packed image-groups per grid step."""
    L = P * C                            # lane width of all intermediates
    H1, W1 = H - K + 1, W - K + 1        # after conv1 (VALID)
    H2, W2 = H1 - K + 1, W1 - K + 1      # after conv2 (VALID)

    def kernel(x_ref, w1_ref, b1_ref, w2_ref, b2_ref, o_ref):
        # ---- conv1: 1 -> C channels, KxK, stride 1, VALID ----
        # x_ref is already laid out (GB, H, W, P*C) with lane p*C+c = image p,
        # so each tap is a pure VPU mul+add; windows are read straight from
        # the VMEM ref (x never pinned in vregs).
        h = jnp.zeros((GB, H1, W1, L), jnp.float32)
        for kh in range(K):                                     # static K*K unroll
            for kw in range(K):
                tap = kh * K + kw
                h = h + x_ref[:, kh:kh + H1, kw:kw + W1, :] * w1_ref[tap, :]
        h = jnp.tanh(h + b1_ref[0, :])                          # (GB, H1, W1, L)

        # ---- conv2: C -> 1 channel, KxK, stride 1, VALID ----
        acc = jnp.zeros((GB, H2, W2, L), jnp.float32)
        for kh in range(K):
            for kw in range(K):
                tap = kh * K + kw
                acc = acc + h[:, kh:kh + H2, kw:kw + W2, :] * w2_ref[tap, :]

        b2 = b2_ref[0, 0]                                       # scalar from SMEM
        # One XLU lane reduction per packed image segment (not one per tap).
        segs = []
        for p in range(P):
            seg = jnp.sum(acc[..., p * C:(p + 1) * C], axis=-1) + b2   # (GB,H2,W2)
            segs.append(seg)
        out = segs[0] if P == 1 else jnp.concatenate(segs, axis=0)     # (P*GB,H2,W2)
        o_ref[...] = out.astype(o_ref.dtype)

    return kernel


def _resolve_grid_steps(grid_steps, n):
    """Default: 1 grid step on single-TC chips (v5e/v6e); 2 only on v7x."""
    if grid_steps is not None:
        return max(1, min(int(grid_steps), n))
    if n < 2:
        return 1
    try:
        kind = jax.devices()[0].device_kind.lower()
    except Exception:
        return 1
    if "v7" in kind or "7x" in kind:     # only generation with 2 TensorCores/chip
        return 2
    return 1


@functools.partial(jax.jit, static_argnames=("npad", "grid_steps"))
def cnn_window_forward(x_nchw, w1, b1, w2, b2, *, npad, grid_steps=None):
    """x_nchw: (N, 1, H, W); w1: (C,1,K,K); b1: (C,); w2: (1,C,K,K); b2: (1,)."""
    N, cin, H, W = x_nchw.shape
    assert cin == 1
    K = npad + 1
    C = w1.shape[0]
    H1, W1 = H - npad, W - npad
    H2, W2 = H1 - npad, W1 - npad

    G = _resolve_grid_steps(grid_steps, N)        # grid steps
    B = pl.cdiv(N, G)                             # images per grid step
    P = max(1, min(128 // C, B)) if C <= 128 else 1   # images packed on lanes
    GB = pl.cdiv(B, P)                            # packed groups per grid step
    L = P * C
    N_tot = G * GB * P                            # padded image count

    # ---- wrapper-side re-layout (XLA glue only; no kernel compute) ----
    x_imgs = x_nchw[:, 0].astype(jnp.float32)                       # (N, H, W)
    if N_tot != N:
        x_imgs = jnp.pad(x_imgs, ((0, N_tot - N), (0, 0), (0, 0)))
    # (G*GB, H, W, P) then lane-broadcast once here (NOT in the kernel):
    x_k = x_imgs.reshape(G * GB, P, H, W).transpose(0, 2, 3, 1)     # (G*GB,H,W,P)
    x_k = jnp.repeat(x_k, C, axis=-1)                               # (G*GB,H,W,P*C)

    w1_k = jnp.tile(w1.reshape(C, K * K).T.astype(jnp.float32), (1, P))   # (K*K, P*C)
    b1_k = jnp.tile(b1.reshape(1, C).astype(jnp.float32), (1, P))         # (1, P*C)
    w2_k = jnp.tile(w2.reshape(C, K * K).T.astype(jnp.float32), (1, P))   # (K*K, P*C)
    b2_k = b2.reshape(1, 1).astype(jnp.float32)                           # SMEM scalar

    out = pl.pallas_call(
        _make_cnn_window_kernel(K, H, W, C, P, GB),
        out_shape=jax.ShapeDtypeStruct((G * P * GB, H2, W2), x_nchw.dtype),
        grid=(G,),
        in_specs=[
            pl.BlockSpec((GB, H, W, L), lambda i: (i, 0, 0, 0)),
            pl.BlockSpec((K * K, L), lambda i: (0, 0)),
            pl.BlockSpec((1, L), lambda i: (0, 0)),
            pl.BlockSpec((K * K, L), lambda i: (0, 0)),
            pl.BlockSpec(memory_space=pltpu.MemorySpace.SMEM),
        ],
        out_specs=pl.BlockSpec((P * GB, H2, W2), lambda i: (i, 0, 0)),
        compiler_params=pltpu.CompilerParams(dimension_semantics=("parallel",)),
    )(x_k, w1_k, b1_k, w2_k, b2_k)

    # Un-permute (g, p, gb) rows back to image order n = (g*GB + gb)*P + p.
    out = out.reshape(G, P, GB, H2, W2).transpose(0, 2, 1, 3, 4)
    out = out.reshape(N_tot, H2, W2)[:N]
    return out.reshape(N, 1, H2, W2)


def _ref_forward(x, w1, b1, w2, b2):
    """Pure-JAX reference matching torch's Conv2d (NCHW / OIHW, VALID, stride 1)."""
    dn = ("NCHW", "OIHW", "NCHW")
    y = jax.lax.conv_general_dilated(x, w1, (1, 1), "VALID", dimension_numbers=dn)
    y = y + b1[None, :, None, None]
    y = jnp.tanh(y)
    y = jax.lax.conv_general_dilated(y, w2, (1, 1), "VALID", dimension_numbers=dn)
    y = y + b2[None, :, None, None]
    return y


if __name__ == "__main__":
    npad = 2                      # -> kernel size K = 3
    K = npad + 1
    C = 32                        # hidden channels (fixed by the module)
    N, H, W = 2, 16, 16           # small NCHW input (N, 1, H, W)
    obj_len, target_len = 16, 12  # unused by forward (module just stores them)

    key = jax.random.PRNGKey(0)
    kx, k1, k2, k3, k4 = jax.random.split(key, 5)

    x = jax.random.normal(kx, (N, 1, H, W), dtype=jnp.float32)

    # Deterministic Conv2d-style init: uniform(-1/sqrt(fan_in), 1/sqrt(fan_in)).
    fan1 = 1 * K * K
    fan2 = C * K * K
    w1 = jax.random.uniform(k1, (C, 1, K, K), jnp.float32, -1.0, 1.0) / jnp.sqrt(fan1)
    b1 = jax.random.uniform(k2, (C,), jnp.float32, -1.0, 1.0) / jnp.sqrt(fan1)
    w2 = jax.random.uniform(k3, (1, C, K, K), jnp.float32, -1.0, 1.0) / jnp.sqrt(fan2)
    b2 = jax.random.uniform(k4, (1,), jnp.float32, -1.0, 1.0) / jnp.sqrt(fan2)

    out = cnn_window_forward(x, w1, b1, w2, b2, npad=npad)
    out = jax.block_until_ready(out)

    ref = _ref_forward(x, w1, b1, w2, b2)
    assert out.shape == (N, 1, H - 2 * npad, W - 2 * npad), out.shape
    assert jnp.allclose(out, ref, atol=1e-4, rtol=1e-4), float(jnp.abs(out - ref).max())

    print("KERNEL_OK")
</pallas_src>

<mosaic_0001>
module attributes {stable_mosaic.version = 11 : i64} {
  func.func @kernel(%arg0: i32, %arg1: memref<1x16x16x64xf32, #tpu.memory_space<vmem>>, %arg2: memref<9x64xf32, #tpu.memory_space<vmem>>, %arg3: memref<1x64xf32, #tpu.memory_space<vmem>>, %arg4: memref<9x64xf32, #tpu.memory_space<vmem>>, %arg5: memref<1x1xf32, #tpu.memory_space<smem>>, %arg6: memref<2x12x12xf32, #tpu.memory_space<vmem>>) attributes {dimension_semantics = [#tpu.dimension_semantics<parallel>], iteration_bounds = array<i64: 1>, scalar_prefetch = 0 : i64, scratch_operands = 0 : i64, tpu.core_type = #tpu.core_type<tc>, window_params = [{transform_indices = @transform_0, window_bounds = array<i64: 1, 16, 16, 64>}, {pipeline_mode = #tpu.pipeline_mode<synchronous>, transform_indices = @transform_1, window_bounds = array<i64: 9, 64>}, {pipeline_mode = #tpu.pipeline_mode<synchronous>, transform_indices = @transform_2, window_bounds = array<i64: 1, 64>}, {pipeline_mode = #tpu.pipeline_mode<synchronous>, transform_indices = @transform_3, window_bounds = array<i64: 9, 64>}, {transform_indices = @transform_4, window_bounds = array<i64: 1, 1>}, {transform_indices = @transform_5, window_bounds = array<i64: 2, 12, 12>}]} {
    %cst = arith.constant 0.000000e+00 : f32
    %0 = vector.broadcast %cst : f32 to vector<1x14x14x64xf32>
    %c0 = arith.constant 0 : index
    %c0_0 = arith.constant 0 : index
    %c0_1 = arith.constant 0 : index
    %c0_2 = arith.constant 0 : index
    %1 = vector.load %arg1[%c0, %c0_0, %c0_1, %c0_2] : memref<1x16x16x64xf32, #tpu.memory_space<vmem>>, vector<1x14x14x64xf32>
    %c0_3 = arith.constant 0 : index
    %c0_4 = arith.constant 0 : index
    %2 = vector.load %arg2[%c0_3, %c0_4] : memref<9x64xf32, #tpu.memory_space<vmem>>, vector<1x64xf32>
    %3 = vector.shape_cast %2 : vector<1x64xf32> to vector<64xf32>
    %4 = vector.shape_cast %3 : vector<64xf32> to vector<1x1x1x64xf32>
    %5 = vector.broadcast %4 : vector<1x1x1x64xf32> to vector<1x14x14x64xf32>
    %6 = arith.mulf %1, %5 : vector<1x14x14x64xf32>
    %7 = arith.addf %0, %6 : vector<1x14x14x64xf32>
    %c0_5 = arith.constant 0 : index
    %c0_6 = arith.constant 0 : index
    %c1 = arith.constant 1 : index
    %c0_7 = arith.constant 0 : index
    %8 = vector.load %arg1[%c0_5, %c0_6, %c1, %c0_7] : memref<1x16x16x64xf32, #tpu.memory_space<vmem>>, vector<1x14x14x64xf32>
    %c1_8 = arith.constant 1 : index
    %c0_9 = arith.constant 0 : index
    %9 = vector.load %arg2[%c1_8, %c0_9] : memref<9x64xf32, #tpu.memory_space<vmem>>, vector<1x64xf32>
    %10 = vector.shape_cast %9 : vector<1x64xf32> to vector<64xf32>
    %11 = vector.shape_cast %10 : vector<64xf32> to vector<1x1x1x64xf32>
    %12 = vector.broadcast %11 : vector<1x1x1x64xf32> to vector<1x14x14x64xf32>
    %13 = arith.mulf %8, %12 : vector<1x14x14x64xf32>
    %14 = arith.addf %7, %13 : vector<1x14x14x64xf32>
    %c0_10 = arith.constant 0 : index
    %c0_11 = arith.constant 0 : index
    %c2 = arith.constant 2 : index
    %c0_12 = arith.constant 0 : index
    %15 = vector.load %arg1[%c0_10, %c0_11, %c2, %c0_12] : memref<1x16x16x64xf32, #tpu.memory_space<vmem>>, vector<1x14x14x64xf32>
    %c2_13 = arith.constant 2 : index
    %c0_14 = arith.constant 0 : index
    %16 = vector.load %arg2[%c2_13, %c0_14] : memref<9x64xf32, #tpu.memory_space<vmem>>, vector<1x64xf32>
    %17 = vector.shape_cast %16 : vector<1x64xf32> to vector<64xf32>
    %18 = vector.shape_cast %17 : vector<64xf32> to vector<1x1x1x64xf32>
    %19 = vector.broadcast %18 : vector<1x1x1x64xf32> to vector<1x14x14x64xf32>
    %20 = arith.mulf %15, %19 : vector<1x14x14x64xf32>
    %21 = arith.addf %14, %20 : vector<1x14x14x64xf32>
    %c0_15 = arith.constant 0 : index
    %c1_16 = arith.constant 1 : index
    %c0_17 = arith.constant 0 : index
    %c0_18 = arith.constant 0 : index
    %22 = vector.load %arg1[%c0_15, %c1_16, %c0_17, %c0_18] : memref<1x16x16x64xf32, #tpu.memory_space<vmem>>, vector<1x14x14x64xf32>
    %c3 = arith.constant 3 : index
    %c0_19 = arith.constant 0 : index
    %23 = vector.load %arg2[%c3, %c0_19] : memref<9x64xf32, #tpu.memory_space<vmem>>, vector<1x64xf32>
    %24 = vector.shape_cast %23 : vector<1x64xf32> to vector<64xf32>
    %25 = vector.shape_cast %24 : vector<64xf32> to vector<1x1x1x64xf32>
    %26 = vector.broadcast %25 : vector<1x1x1x64xf32> to vector<1x14x14x64xf32>
    %27 = arith.mulf %22, %26 : vector<1x14x14x64xf32>
    %28 = arith.addf %21, %27 : vector<1x14x14x64xf32>
    %c0_20 = arith.constant 0 : index
    %c1_21 = arith.constant 1 : index
    %c1_22 = arith.constant 1 : index
    %c0_23 = arith.constant 0 : index
    %29 = vector.load %arg1[%c0_20, %c1_21, %c1_22, %c0_23] : memref<1x16x16x64xf32, #tpu.memory_space<vmem>>, vector<1x14x14x64xf32>
    %c4 = arith.constant 4 : index
    %c0_24 = arith.constant 0 : index
    %30 = vector.load %arg2[%c4, %c0_24] : memref<9x64xf32, #tpu.memory_space<vmem>>, vector<1x64xf32>
    %31 = vector.shape_cast %30 : vector<1x64xf32> to vector<64xf32>
    %32 = vector.shape_cast %31 : vector<64xf32> to vector<1x1x1x64xf32>
    %33 = vector.broadcast %32 : vector<1x1x1x64xf32> to vector<1x14x14x64xf32>
    %34 = arith.mulf %29, %33 : vector<1x14x14x64xf32>
    %35 = arith.addf %28, %34 : vector<1x14x14x64xf32>
    %c0_25 = arith.constant 0 : index
    %c1_26 = arith.constant 1 : index
    %c2_27 = arith.constant 2 : index
    %c0_28 = arith.constant 0 : index
    %36 = vector.load %arg1[%c0_25, %c1_26, %c2_27, %c0_28] : memref<1x16x16x64xf32, #tpu.memory_space<vmem>>, vector<1x14x14x64xf32>
    %c5 = arith.constant 5 : index
    %c0_29 = arith.constant 0 : index
    %37 = vector.load %arg2[%c5, %c0_29] : memref<9x64xf32, #tpu.memory_space<vmem>>, vector<1x64xf32>
    %38 = vector.shape_cast %37 : vector<1x64xf32> to vector<64xf32>
    %39 = vector.shape_cast %38 : vector<64xf32> to vector<1x1x1x64xf32>
    %40 = vector.broadcast %39 : vector<1x1x1x64xf32> to vector<1x14x14x64xf32>
    %41 = arith.mulf %36, %40 : vector<1x14x14x64xf32>
    %42 = arith.addf %35, %41 : vector<1x14x14x64xf32>
    %c0_30 = arith.constant 0 : index
    %c2_31 = arith.constant 2 : index
    %c0_32 = arith.constant 0 : index
    %c0_33 = arith.constant 0 : index
    %43 = vector.load %arg1[%c0_30, %c2_31, %c0_32, %c0_33] : memref<1x16x16x64xf32, #tpu.memory_space<vmem>>, vector<1x14x14x64xf32>
    %c6 = arith.constant 6 : index
    %c0_34 = arith.constant 0 : index
    %44 = vector.load %arg2[%c6, %c0_34] : memref<9x64xf32, #tpu.memory_space<vmem>>, vector<1x64xf32>
    %45 = vector.shape_cast %44 : vector<1x64xf32> to vector<64xf32>
    %46 = vector.shape_cast %45 : vector<64xf32> to vector<1x1x1x64xf32>
    %47 = vector.broadcast %46 : vector<1x1x1x64xf32> to vector<1x14x14x64xf32>
    %48 = arith.mulf %43, %47 : vector<1x14x14x64xf32>
    %49 = arith.addf %42, %48 : vector<1x14x14x64xf32>
    %c0_35 = arith.constant 0 : index
    %c2_36 = arith.constant 2 : index
    %c1_37 = arith.constant 1 : index
    %c0_38 = arith.constant 0 : index
    %50 = vector.load %arg1[%c0_35, %c2_36, %c1_37, %c0_38] : memref<1x16x16x64xf32, #tpu.memory_space<vmem>>, vector<1x14x14x64xf32>
    %c7 = arith.constant 7 : index
    %c0_39 = arith.constant 0 : index
    %51 = vector.load %arg2[%c7, %c0_39] : memref<9x64xf32, #tpu.memory_space<vmem>>, vector<1x64xf32>
    %52 = vector.shape_cast %51 : vector<1x64xf32> to vector<64xf32>
    %53 = vector.shape_cast %52 : vector<64xf32> to vector<1x1x1x64xf32>
    %54 = vector.broadcast %53 : vector<1x1x1x64xf32> to vector<1x14x14x64xf32>
    %55 = arith.mulf %50, %54 : vector<1x14x14x64xf32>
    %56 = arith.addf %49, %55 : vector<1x14x14x64xf32>
    %c0_40 = arith.constant 0 : index
    %c2_41 = arith.constant 2 : index
    %c2_42 = arith.constant 2 : index
    %c0_43 = arith.constant 0 : index
    %57 = vector.load %arg1[%c0_40, %c2_41, %c2_42, %c0_43] : memref<1x16x16x64xf32, #tpu.memory_space<vmem>>, vector<1x14x14x64xf32>
    %c8 = arith.constant 8 : index
    %c0_44 = arith.constant 0 : index
    %58 = vector.load %arg2[%c8, %c0_44] : memref<9x64xf32, #tpu.memory_space<vmem>>, vector<1x64xf32>
    %59 = vector.shape_cast %58 : vector<1x64xf32> to vector<64xf32>
    %60 = vector.shape_cast %59 : vector<64xf32> to vector<1x1x1x64xf32>
    %61 = vector.broadcast %60 : vector<1x1x1x64xf32> to vector<1x14x14x64xf32>
    %62 = arith.mulf %57, %61 : vector<1x14x14x64xf32>
    %63 = arith.addf %56, %62 : vector<1x14x14x64xf32>
    %c0_45 = arith.constant 0 : index
    %c0_46 = arith.constant 0 : index
    %64 = vector.load %arg3[%c0_45, %c0_46] : memref<1x64xf32, #tpu.memory_space<vmem>>, vector<1x64xf32>
    %65 = vector.shape_cast %64 : vector<1x64xf32> to vector<64xf32>
    %66 = vector.shape_cast %65 : vector<64xf32> to vector<1x1x1x64xf32>
    %67 = vector.broadcast %66 : vector<1x1x1x64xf32> to vector<1x14x14x64xf32>
    %68 = arith.addf %63, %67 : vector<1x14x14x64xf32>
    %69 = math.tanh %68 : vector<1x14x14x64xf32>
    %cst_47 = arith.constant 0.000000e+00 : f32
    %70 = vector.broadcast %cst_47 : f32 to vector<1x12x12x64xf32>
    %71 = vector.extract_strided_slice %69 {offsets = [0, 0, 0, 0], sizes = [1, 12, 12, 64], strides = [1, 1, 1, 1]} : vector<1x14x14x64xf32> to vector<1x12x12x64xf32>
    %c0_48 = arith.constant 0 : index
    %c0_49 = arith.constant 0 : index
    %72 = vector.load %arg4[%c0_48, %c0_49] : memref<9x64xf32, #tpu.memory_space<vmem>>, vector<1x64xf32>
    %73 = vector.shape_cast %72 : vector<1x64xf32> to vector<64xf32>
    %74 = vector.shape_cast %73 : vector<64xf32> to vector<1x1x1x64xf32>
    %75 = vector.broadcast %74 : vector<1x1x1x64xf32> to vector<1x12x12x64xf32>
    %76 = arith.mulf %71, %75 : vector<1x12x12x64xf32>
    %77 = arith.addf %70, %76 : vector<1x12x12x64xf32>
    %78 = vector.extract_strided_slice %69 {offsets = [0, 0, 1, 0], sizes = [1, 12, 12, 64], strides = [1, 1, 1, 1]} : vector<1x14x14x64xf32> to vector<1x12x12x64xf32>
    %c1_50 = arith.constant 1 : index
    %c0_51 = arith.constant 0 : index
    %79 = vector.load %arg4[%c1_50, %c0_51] : memref<9x64xf32, #tpu.memory_space<vmem>>, vector<1x64xf32>
    %80 = vector.shape_cast %79 : vector<1x64xf32> to vector<64xf32>
    %81 = vector.shape_cast %80 : vector<64xf32> to vector<1x1x1x64xf32>
    %82 = vector.broadcast %81 : vector<1x1x1x64xf32> to vector<1x12x12x64xf32>
    %83 = arith.mulf %78, %82 : vector<1x12x12x64xf32>
    %84 = arith.addf %77, %83 : vector<1x12x12x64xf32>
    %85 = vector.extract_strided_slice %69 {offsets = [0, 0, 2, 0], sizes = [1, 12, 12, 64], strides = [1, 1, 1, 1]} : vector<1x14x14x64xf32> to vector<1x12x12x64xf32>
    %c2_52 = arith.constant 2 : index
    %c0_53 = arith.constant 0 : index
    %86 = vector.load %arg4[%c2_52, %c0_53] : memref<9x64xf32, #tpu.memory_space<vmem>>, vector<1x64xf32>
    %87 = vector.shape_cast %86 : vector<1x64xf32> to vector<64xf32>
    %88 = vector.shape_cast %87 : vector<64xf32> to vector<1x1x1x64xf32>
    %89 = vector.broadcast %88 : vector<1x1x1x64xf32> to vector<1x12x12x64xf32>
    %90 = arith.mulf %85, %89 : vector<1x12x12x64xf32>
    %91 = arith.addf %84, %90 : vector<1x12x12x64xf32>
    %92 = vector.extract_strided_slice %69 {offsets = [0, 1, 0, 0], sizes = [1, 12, 12, 64], strides = [1, 1, 1, 1]} : vector<1x14x14x64xf32> to vector<1x12x12x64xf32>
    %c3_54 = arith.constant 3 : index
    %c0_55 = arith.constant 0 : index
    %93 = vector.load %arg4[%c3_54, %c0_55] : memref<9x64xf32, #tpu.memory_space<vmem>>, vector<1x64xf32>
    %94 = vector.shape_cast %93 : vector<1x64xf32> to vector<64xf32>
    %95 = vector.shape_cast %94 : vector<64xf32> to vector<1x1x1x64xf32>
    %96 = vector.broadcast %95 : vector<1x1x1x64xf32> to vector<1x12x12x64xf32>
    %97 = arith.mulf %92, %96 : vector<1x12x12x64xf32>
    %98 = arith.addf %91, %97 : vector<1x12x12x64xf32>
    %99 = vector.extract_strided_slice %69 {offsets = [0, 1, 1, 0], sizes = [1, 12, 12, 64], strides = [1, 1, 1, 1]} : vector<1x14x14x64xf32> to vector<1x12x12x64xf32>
    %c4_56 = arith.constant 4 : index
    %c0_57 = arith.constant 0 : index
    %100 = vector.load %arg4[%c4_56, %c0_57] : memref<9x64xf32, #tpu.memory_space<vmem>>, vector<1x64xf32>
    %101 = vector.shape_cast %100 : vector<1x64xf32> to vector<64xf32>
    %102 = vector.shape_cast %101 : vector<64xf32> to vector<1x1x1x64xf32>
    %103 = vector.broadcast %102 : vector<1x1x1x64xf32> to vector<1x12x12x64xf32>
    %104 = arith.mulf %99, %103 : vector<1x12x12x64xf32>
    %105 = arith.addf %98, %104 : vector<1x12x12x64xf32>
    %106 = vector.extract_strided_slice %69 {offsets = [0, 1, 2, 0], sizes = [1, 12, 12, 64], strides = [1, 1, 1, 1]} : vector<1x14x14x64xf32> to vector<1x12x12x64xf32>
    %c5_58 = arith.constant 5 : index
    %c0_59 = arith.constant 0 : index
    %107 = vector.load %arg4[%c5_58, %c0_59] : memref<9x64xf32, #tpu.memory_space<vmem>>, vector<1x64xf32>
    %108 = vector.shape_cast %107 : vector<1x64xf32> to vector<64xf32>
    %109 = vector.shape_cast %108 : vector<64xf32> to vector<1x1x1x64xf32>
    %110 = vector.broadcast %109 : vector<1x1x1x64xf32> to vector<1x12x12x64xf32>
    %111 = arith.mulf %106, %110 : vector<1x12x12x64xf32>
    %112 = arith.addf %105, %111 : vector<1x12x12x64xf32>
    %113 = vector.extract_strided_slice %69 {offsets = [0, 2, 0, 0], sizes = [1, 12, 12, 64], strides = [1, 1, 1, 1]} : vector<1x14x14x64xf32> to vector<1x12x12x64xf32>
    %c6_60 = arith.constant 6 : index
    %c0_61 = arith.constant 0 : index
    %114 = vector.load %arg4[%c6_60, %c0_61] : memref<9x64xf32, #tpu.memory_space<vmem>>, vector<1x64xf32>
    %115 = vector.shape_cast %114 : vector<1x64xf32> to vector<64xf32>
    %116 = vector.shape_cast %115 : vector<64xf32> to vector<1x1x1x64xf32>
    %117 = vector.broadcast %116 : vector<1x1x1x64xf32> to vector<1x12x12x64xf32>
    %118 = arith.mulf %113, %117 : vector<1x12x12x64xf32>
    %119 = arith.addf %112, %118 : vector<1x12x12x64xf32>
    %120 = vector.extract_strided_slice %69 {offsets = [0, 2, 1, 0], sizes = [1, 12, 12, 64], strides = [1, 1, 1, 1]} : vector<1x14x14x64xf32> to vector<1x12x12x64xf32>
    %c7_62 = arith.constant 7 : index
    %c0_63 = arith.constant 0 : index
    %121 = vector.load %arg4[%c7_62, %c0_63] : memref<9x64xf32, #tpu.memory_space<vmem>>, vector<1x64xf32>
    %122 = vector.shape_cast %121 : vector<1x64xf32> to vector<64xf32>
    %123 = vector.shape_cast %122 : vector<64xf32> to vector<1x1x1x64xf32>
    %124 = vector.broadcast %123 : vector<1x1x1x64xf32> to vector<1x12x12x64xf32>
    %125 = arith.mulf %120, %124 : vector<1x12x12x64xf32>
    %126 = arith.addf %119, %125 : vector<1x12x12x64xf32>
    %127 = vector.extract_strided_slice %69 {offsets = [0, 2, 2, 0], sizes = [1, 12, 12, 64], strides = [1, 1, 1, 1]} : vector<1x14x14x64xf32> to vector<1x12x12x64xf32>
    %c8_64 = arith.constant 8 : index
    %c0_65 = arith.constant 0 : index
    %128 = vector.load %arg4[%c8_64, %c0_65] : memref<9x64xf32, #tpu.memory_space<vmem>>, vector<1x64xf32>
    %129 = vector.shape_cast %128 : vector<1x64xf32> to vector<64xf32>
    %130 = vector.shape_cast %129 : vector<64xf32> to vector<1x1x1x64xf32>
    %131 = vector.broadcast %130 : vector<1x1x1x64xf32> to vector<1x12x12x64xf32>
    %132 = arith.mulf %127, %131 : vector<1x12x12x64xf32>
    %133 = arith.addf %126, %132 : vector<1x12x12x64xf32>
    %c0_66 = arith.constant 0 : index
    %c0_67 = arith.constant 0 : index
    %134 = memref.load %arg5[%c0_66, %c0_67] : memref<1x1xf32, #tpu.memory_space<smem>>
    %135 = vector.extract_strided_slice %133 {offsets = [0, 0, 0, 0], sizes = [1, 12, 12, 32], strides = [1, 1, 1, 1]} : vector<1x12x12x64xf32> to vector<1x12x12x32xf32>
    %cst_68 = arith.constant dense<0.000000e+00> : vector<1x12x12xf32>
    %136 = vector.multi_reduction <add>, %135, %cst_68 [3] : vector<1x12x12x32xf32> to vector<1x12x12xf32>
    %137 = vector.broadcast %134 : f32 to vector<1x12x12xf32>
    %138 = arith.addf %136, %137 : vector<1x12x12xf32>
    %139 = vector.extract_strided_slice %133 {offsets = [0, 0, 0, 32], sizes = [1, 12, 12, 32], strides = [1, 1, 1, 1]} : vector<1x12x12x64xf32> to vector<1x12x12x32xf32>
    %cst_69 = arith.constant dense<0.000000e+00> : vector<1x12x12xf32>
    %140 = vector.multi_reduction <add>, %139, %cst_69 [3] : vector<1x12x12x32xf32> to vector<1x12x12xf32>
    %141 = vector.broadcast %134 : f32 to vector<1x12x12xf32>
    %142 = arith.addf %140, %141 : vector<1x12x12xf32>
    %143 = tpu.concatenate %138, %142 in 0 : vector<1x12x12xf32>, vector<1x12x12xf32> -> vector<2x12x12xf32>
    %c0_70 = arith.constant 0 : index
    %c0_71 = arith.constant 0 : index
    %c0_72 = arith.constant 0 : index
    %144 = vector.load %arg6[%c0_70, %c0_71, %c0_72] : memref<2x12x12xf32, #tpu.memory_space<vmem>>, vector<2x12x12xf32>
    tpu.vector_store %arg6[%c0_70, %c0_71, %c0_72], %143 {strides = array<i32>} : memref<2x12x12xf32, #tpu.memory_space<vmem>>, vector<2x12x12xf32>,
    return
  }
  func.func @transform_0(%arg0: i32) -> (i32, i32, i32, i32) {
    %c0_i32 = arith.constant 0 : i32
    %c0_i32_0 = arith.constant 0 : i32
    %c0_i32_1 = arith.constant 0 : i32
    %c0_i32_2 = arith.constant 0 : i32
    return %arg0, %c0_i32, %c0_i32_0, %c0_i32_1 : i32, i32, i32, i32
  }
  func.func @transform_1(%arg0: i32) -> (i32, i32) {
    %c0_i32 = arith.constant 0 : i32
    %c0_i32_0 = arith.constant 0 : i32
    %c0_i32_1 = arith.constant 0 : i32
    return %c0_i32, %c0_i32_0 : i32, i32
  }
  func.func @transform_2(%arg0: i32) -> (i32, i32) {
    %c0_i32 = arith.constant 0 : i32
    %c0_i32_0 = arith.constant 0 : i32
    %c0_i32_1 = arith.constant 0 : i32
    return %c0_i32, %c0_i32_0 : i32, i32
  }
  func.func @transform_3(%arg0: i32) -> (i32, i32) {
    %c0_i32 = arith.constant 0 : i32
    %c0_i32_0 = arith.constant 0 : i32
    %c0_i32_1 = arith.constant 0 : i32
    return %c0_i32, %c0_i32_0 : i32, i32
  }
  func.func @transform_4(%arg0: i32) -> (i32, i32) {
    %c0_i32 = arith.constant 0 : i32
    %c0_i32_0 = arith.constant 0 : i32
    %c0_i32_1 = arith.constant 0 : i32
    return %c0_i32, %c0_i32_0 : i32, i32
  }
  func.func @transform_5(%arg0: i32) -> (i32, i32, i32) {
    %c0_i32 = arith.constant 0 : i32
    %c0_i32_0 = arith.constant 0 : i32
    %c0_i32_1 = arith.constant 0 : i32
    return %arg0, %c0_i32, %c0_i32_0 : i32, i32, i32
  }
}

</mosaic_0001>

<llo_original>
// kernel: tile.18
$region0: #{tile.18}
  %s0 = inlined_call_operand.vmem [shape: f32[9,2,32], index: 0, kind: input, shape index: {}]
  %s1 = inlined_call_operand.vmem [shape: f32[9,64], index: 1, kind: output, shape index: {}]
  $region1: #{tile.18} parent=0
    #allocation0 [shape = 'u8[36864]{0}', space=vmem, size = 0x9000, scoped, tag = 'scoped mem for input reshape']
    %s3 = sshllo.u32 0, 2
    %s4 = smul.addr 2, 8
    %s5 = scalar_lea.vmem %s0, %s4
    %v6 = vld [vmem:[%s5] sm:%s3]
    %s7 = scalar_lea.vmem [#allocation0], 64
    %8 = vst [vmem:[%s7] sm:%s3] %v6
    %s9 = smul.addr 2, 7
    %s10 = scalar_lea.vmem %s0, %s9
    %v11 = vld [vmem:[%s10] sm:%s3]
    %s12 = scalar_lea.vmem [#allocation0], 56
    %13 = vst [vmem:[%s12] sm:%s3] %v11
    %s14 = smul.addr 2, 6
    %s15 = scalar_lea.vmem %s0, %s14
    %v16 = vld [vmem:[%s15] sm:%s3]
    %s17 = scalar_lea.vmem [#allocation0], 48
    %18 = vst [vmem:[%s17] sm:%s3] %v16
    %s19 = smul.addr 2, 5
    %s20 = scalar_lea.vmem %s0, %s19
    %v21 = vld [vmem:[%s20] sm:%s3]
    %s22 = scalar_lea.vmem [#allocation0], 40
    %23 = vst [vmem:[%s22] sm:%s3] %v21
    %s24 = smul.addr 2, 4
    %s25 = scalar_lea.vmem %s0, %s24
    %v26 = vld [vmem:[%s25] sm:%s3]
    %s27 = scalar_lea.vmem [#allocation0], 32
    %28 = vst [vmem:[%s27] sm:%s3] %v26
    %s29 = smul.addr 2, 3
    %s30 = scalar_lea.vmem %s0, %s29
    %v31 = vld [vmem:[%s30] sm:%s3]
    %s32 = scalar_lea.vmem [#allocation0], 24
    %33 = vst [vmem:[%s32] sm:%s3] %v31
    %s34 = smul.addr 2, 2
    %s35 = scalar_lea.vmem %s0, %s34
    %v36 = vld [vmem:[%s35] sm:%s3]
    %s37 = scalar_lea.vmem [#allocation0], 16
    %38 = vst [vmem:[%s37] sm:%s3] %v36
    %s39 = scalar_lea.vmem %s0, 2
    %v40 = vld [vmem:[%s39] sm:%s3]
    %s41 = scalar_lea.vmem [#allocation0], 8
    %42 = vst [vmem:[%s41] sm:%s3] %v40
    %v43 = vld [vmem:[%s0] sm:%s3]
    %44 = vst [vmem:[#allocation0] sm:%s3] %v43
    %v45 = vld [vmem:[#allocation0] ss:$8 sm:$0xf]
    %v46 = vld [vmem:[#allocation0] ss:$8 sm:$0xf0]
    %vm47 = vcmask 1047556
    %v48 = vsel %vm47, %v46, %v45
    %vm49 = vcmask 261120
    %50 = vst.msk [vmem:[%s1] sm:$0xff] %vm49, %v48
    %s51 = scalar_lea.vmem [#allocation0], 64
    %v52 = vld [vmem:[%s51] sm:$0x1]
    %vm53 = vcmask 261120
    %s54 = scalar_lea.vmem %s1, 8
    %55 = vst.msk [vmem:[%s54] sm:$0x1] %vm53, %v52
    %s56 = scalar_lea.vmem [#allocation0], 1
    %v57 = vld [vmem:[%s56] ss:$8 sm:$0xf]
    %s58 = scalar_lea.vmem [#allocation0], 1
    %v59 = vld [vmem:[%s58] ss:$8 sm:$0xf0]
    %vm60 = vcmask 1047556
    %v61 = vsel %vm60, %v59, %v57
    %62 = vrot.lane.b32.xlu0 %v61, 32
    %v63 = vpop.permute.xlu0 %62
    %vm64 = vcmask 523520
    %65 = vst.msk [vmem:[%s1] sm:$0xff] %vm64, %v63
    %s66 = scalar_lea.vmem [#allocation0], 65
    %v67 = vld [vmem:[%s66] sm:$0x1]
    %68 = vrot.lane.b32.xlu0 %v67, 32
    %v69 = vpop.permute.xlu0 %68
    %vm70 = vcmask 523520
    %s71 = scalar_lea.vmem %s1, 8
    %72 = vst.msk [vmem:[%s71] sm:$0x1] %vm70, %v69

// kernel: cnn_window_forward.1
$region0: #{cnn_window_forward.1}
  #allocation0 [shape = 'u32[]', space=smem, size = 0x4, offset = 0x4, fixed_abs, tag = 'smem constant byte address 0x4 - core index']
  #allocation1 [shape = 'u32[144,128]{1,0:T(1,128)}', space=vmem, size = 0x12000, scoped, tag = 'internal scratch']
  #allocation2 [shape = 'f32[1,1]{1,0:T(1,128)S(6)}', space=smem, size = 0x200, scoped, tag = 'scoped memory for cnn_window_forward.1']
  %s0 = inlined_call_operand.vmem [shape: f32[1,16,16,64], index: 0, kind: input, shape index: {}]
  %s1 = inlined_call_operand.vmem [shape: f32[9,64], index: 1, kind: input, shape index: {}]
  %s2 = inlined_call_operand.vmem [shape: f32[1,64], index: 2, kind: input, shape index: {}]
  %s3 = inlined_call_operand.vmem [shape: f32[9,64], index: 3, kind: input, shape index: {}]
  %s4 = inlined_call_operand.<no memory space> [shape: f32[1,1], index: 4, kind: input, shape index: {}]
  %s5 = inlined_call_operand.vmem [shape: f32[2,12,12], index: 5, kind: output, shape index: {}]
  %s6 = sld [smem:[#allocation0]]
  $region30: #{cnn_window_forward.1} parent=0
    _
  %s8 = ssub.s32 1, %s6
  %s9 = scalar_select 0, %s8, %s6
  %10 = sst [smem:[#allocation2]] %s4
  // Predicated region
  $region2: #{cnn_window_forward.1} parent=0 // pred_check
    _
  $region3: #{cnn_window_forward.1} parent=0 // pred_check_branch
    %12 = sbr.rel (0) target = $region5
  $region4: #{cnn_window_forward.1} parent=0 // pred_region
    _
  $region5: #{cnn_window_forward.1} parent=0 // pred_fallthru
    _
  // Predicated region
  $region6: #{cnn_window_forward.1} parent=0 // pred_check
    _
  $region7: #{cnn_window_forward.1} parent=0 // pred_check_branch
    %14 = sbr.rel (0) target = $region9
  $region8: #{cnn_window_forward.1} parent=0 // pred_region
    _
  $region9: #{cnn_window_forward.1} parent=0 // pred_fallthru
    _
  // Predicated region
  $region10: #{cnn_window_forward.1} parent=0 // pred_check
    _
  $region11: #{cnn_window_forward.1} parent=0 // pred_check_branch
    %16 = sbr.rel (0) target = $region13
  $region12: #{cnn_window_forward.1} parent=0 // pred_region
    _
  $region13: #{cnn_window_forward.1} parent=0 // pred_fallthru
    _
  // Predicated region
  $region14: #{cnn_window_forward.1} parent=0 // pred_check
    _
  $region15: #{cnn_window_forward.1} parent=0 // pred_check_branch
    %18 = sbr.rel (0) target = $region17
  $region16: #{cnn_window_forward.1} parent=0 // pred_region
    _
  $region17: #{cnn_window_forward.1} parent=0 // pred_fallthru
    _
  // Predicated region
  $region18: #{cnn_window_forward.1} parent=0 // pred_check
    _
  $region19: #{cnn_window_forward.1} parent=0 // pred_check_branch
    %20 = sbr.rel (0) target = $region21
  $region20: #{cnn_window_forward.1} parent=0 // pred_region
    _
  $region21: #{cnn_window_forward.1} parent=0 // pred_fallthru
    _
  %v21 = vld [vmem:[%s0] sm:$0xff]
  %v22 = vld [vmem:[%s0 + $0x8] sm:$0x3f]
  %v23 = vld [vmem:[%s0 + $0x10] sm:$0xff]
  %v24 = vld [vmem:[%s0 + $0x18] sm:$0x3f]
  %v25 = vld [vmem:[%s0 + $0x20] sm:$0xff]
  %v26 = vld [vmem:[%s0 + $0x28] sm:$0x3f]
  %v27 = vld [vmem:[%s0 + $0x30] sm:$0xff]
  %v28 = vld [vmem:[%s0 + $0x38] sm:$0x3f]
  %v29 = vld [vmem:[%s0 + $0x40] sm:$0xff]
  %v30 = vld [vmem:[%s0 + $0x48] sm:$0x3f]
  %v31 = vld [vmem:[%s0 + $0x50] sm:$0xff]
  %v32 = vld [vmem:[%s0 + $0x58] sm:$0x3f]
  %v33 = vld [vmem:[%s0 + $0x60] sm:$0xff]
  %v34 = vld [vmem:[%s0 + $0x68] sm:$0x3f]
  %v35 = vld [vmem:[%s0 + $0x70] sm:$0xff]
  %v36 = vld [vmem:[%s0 + $0x78] sm:$0x3f]
  %v37 = vld [vmem:[%s0 + $0x80] sm:$0xff]
  %v38 = vld [vmem:[%s0 + $0x88] sm:$0x3f]
  %v39 = vld [vmem:[%s0 + $0x90] sm:$0xff]
  %v40 = vld [vmem:[%s0 + $0x98] sm:$0x3f]
  %v41 = vld [vmem:[%s0 + $0xa0] sm:$0xff]
  %v42 = vld [vmem:[%s0 + $0xa8] sm:$0x3f]
  %v43 = vld [vmem:[%s0 + $0xb0] sm:$0xff]
  %v44 = vld [vmem:[%s0 + $0xb8] sm:$0x3f]
  %v45 = vld [vmem:[%s0 + $0xc0] sm:$0xff]
  %v46 = vld [vmem:[%s0 + $0xc8] sm:$0x3f]
  %v47 = vld [vmem:[%s0 + $0xd0] sm:$0xff]
  %v48 = vld [vmem:[%s0 + $0xd8] sm:$0x3f]
  %v49 = vld [vmem:[%s1] sm:$0x1]
  %v50 = vlaneseq
  %v51 = vshrl.u32 %v50, 7
  %v52 = vsub.s32 0, %v51
  %v53 = vrot.slane %v49, %v52
  %v54 = vmul.f32 %v21, %v53
  %v55 = vmul.f32 %v22, %v53
  %v56 = vmul.f32 %v23, %v53
  %v57 = vmul.f32 %v24, %v53
  %v58 = vmul.f32 %v25, %v53
  %v59 = vmul.f32 %v26, %v53
  %v60 = vmul.f32 %v27, %v53
  %v61 = vmul.f32 %v28, %v53
  %v62 = vmul.f32 %v29, %v53
  %v63 = vmul.f32 %v30, %v53
  %v64 = vmul.f32 %v31, %v53
  %v65 = vmul.f32 %v32, %v53
  %v66 = vmul.f32 %v33, %v53
  %v67 = vmul.f32 %v34, %v53
  %v68 = vmul.f32 %v35, %v53
  %v69 = vmul.f32 %v36, %v53
  %v70 = vmul.f32 %v37, %v53
  %v71 = vmul.f32 %v38, %v53
  %v72 = vmul.f32 %v39, %v53
  %v73 = vmul.f32 %v40, %v53
  %v74 = vmul.f32 %v41, %v53
  %v75 = vmul.f32 %v42, %v53
  %v76 = vmul.f32 %v43, %v53
  %v77 = vmul.f32 %v44, %v53
  %v78 = vmul.f32 %v45, %v53
  %v79 = vmul.f32 %v46, %v53
  %v80 = vmul.f32 %v47, %v53
  %v81 = vmul.f32 %v48, %v53
  %v82 = vadd.f32 %v54, 0.0
  %v83 = vadd.f32 %v55, 0.0
  %v84 = vadd.f32 %v56, 0.0
  %v85 = vadd.f32 %v57, 0.0
  %v86 = vadd.f32 %v58, 0.0
  %v87 = vadd.f32 %v59, 0.0
  %v88 = vadd.f32 %v60, 0.0
  %v89 = vadd.f32 %v61, 0.0
  %v90 = vadd.f32 %v62, 0.0
  %v91 = vadd.f32 %v63, 0.0
  %v92 = vadd.f32 %v64, 0.0
  %v93 = vadd.f32 %v65, 0.0
  %v94 = vadd.f32 %v66, 0.0
  %v95 = vadd.f32 %v67, 0.0
  %v96 = vadd.f32 %v68, 0.0
  %v97 = vadd.f32 %v69, 0.0
  %v98 = vadd.f32 %v70, 0.0
  %v99 = vadd.f32 %v71, 0.0
  %v100 = vadd.f32 %v72, 0.0
  %v101 = vadd.f32 %v73, 0.0
  %v102 = vadd.f32 %v74, 0.0
  %v103 = vadd.f32 %v75, 0.0
  %v104 = vadd.f32 %v76, 0.0
  %v105 = vadd.f32 %v77, 0.0
  %v106 = vadd.f32 %v78, 0.0
  %v107 = vadd.f32 %v79, 0.0
  %v108 = vadd.f32 %v80, 0.0
  %v109 = vadd.f32 %v81, 0.0
  %v110 = vld [vmem:[%s0 + $0x1] sm:$0xff]
  %v111 = vld [vmem:[%s0 + $0x9] sm:$0x3f]
  %v112 = vld [vmem:[%s0 + $0x11] sm:$0xff]
  %v113 = vld [vmem:[%s0 + $0x19] sm:$0x3f]
  %v114 = vld [vmem:[%s0 + $0x21] sm:$0xff]
  %v115 = vld [vmem:[%s0 + $0x29] sm:$0x3f]
  %v116 = vld [vmem:[%s0 + $0x31] sm:$0xff]
  %v117 = vld [vmem:[%s0 + $0x39] sm:$0x3f]
  %v118 = vld [vmem:[%s0 + $0x41] sm:$0xff]
  %v119 = vld [vmem:[%s0 + $0x49] sm:$0x3f]
  %v120 = vld [vmem:[%s0 + $0x51] sm:$0xff]
  %v121 = vld [vmem:[%s0 + $0x59] sm:$0x3f]
  %v122 = vld [vmem:[%s0 + $0x61] sm:$0xff]
  %v123 = vld [vmem:[%s0 + $0x69] sm:$0x3f]
  %v124 = vld [vmem:[%s0 + $0x71] sm:$0xff]
  %v125 = vld [vmem:[%s0 + $0x79] sm:$0x3f]
  %v126 = vld [vmem:[%s0 + $0x81] sm:$0xff]
  %v127 = vld [vmem:[%s0 + $0x89] sm:$0x3f]
  %v128 = vld [vmem:[%s0 + $0x91] sm:$0xff]
  %v129 = vld [vmem:[%s0 + $0x99] sm:$0x3f]
  %v130 = vld [vmem:[%s0 + $0xa1] sm:$0xff]
  %v131 = vld [vmem:[%s0 + $0xa9] sm:$0x3f]
  %v132 = vld [vmem:[%s0 + $0xb1] sm:$0xff]
  %v133 = vld [vmem:[%s0 + $0xb9] sm:$0x3f]
  %v134 = vld [vmem:[%s0 + $0xc1] sm:$0xff]
  %v135 = vld [vmem:[%s0 + $0xc9] sm:$0x3f]
  %v136 = vld [vmem:[%s0 + $0xd1] sm:$0xff]
  %v137 = vld [vmem:[%s0 + $0xd9] sm:$0x3f]
  %v138 = vld [vmem:[%s1 + $0x1] sm:$0x1]
  %v139 = vlaneseq
  %v140 = vshrl.u32 %v139, 7
  %v141 = vsub.s32 0, %v140
  %v142 = vrot.slane %v138, %v141
  %v143 = vmul.f32 %v110, %v142
  %v144 = vmul.f32 %v111, %v142
  %v145 = vmul.f32 %v112, %v142
  %v146 = vmul.f32 %v113, %v142
  %v147 = vmul.f32 %v114, %v142
  %v148 = vmul.f32 %v115, %v142
  %v149 = vmul.f32 %v116, %v142
  %v150 = vmul.f32 %v117, %v142
  %v151 = vmul.f32 %v118, %v142
  %v152 = vmul.f32 %v119, %v142
  %v153 = vmul.f32 %v120, %v142
  %v154 = vmul.f32 %v121, %v142
  %v155 = vmul.f32 %v122, %v142
  %v156 = vmul.f32 %v123, %v142
  %v157 = vmul.f32 %v124, %v142
  %v158 = vmul.f32 %v125, %v142
  %v159 = vmul.f32 %v126, %v142
  %v160 = vmul.f32 %v127, %v142
  %v161 = vmul.f32 %v128, %v142
  %v162 = vmul.f32 %v129, %v142
  %v163 = vmul.f32 %v130, %v142
  %v164 = vmul.f32 %v131, %v142
  %v165 = vmul.f32 %v132, %v142
  %v166 = vmul.f32 %v133, %v142
  %v167 = vmul.f32 %v134, %v142
  %v168 = vmul.f32 %v135, %v142
  %v169 = vmul.f32 %v136, %v142
  %v170 = vmul.f32 %v137, %v142
  %v171 = vadd.f32 %v82, %v143
  %v172 = vadd.f32 %v83, %v144
  %v173 = vadd.f32 %v84, %v145
  %v174 = vadd.f32 %v85, %v146
  %v175 = vadd.f32 %v86, %v147
  %v176 = vadd.f32 %v87, %v148
  %v177 = vadd.f32 %v88, %v149
  %v178 = vadd.f32 %v89, %v150
  %v179 = vadd.f32 %v90, %v151
  %v180 = vadd.f32 %v91, %v152
  %v181 = vadd.f32 %v92, %v153
  %v182 = vadd.f32 %v93, %v154
  %v183 = vadd.f32 %v94, %v155
  %v184 = vadd.f32 %v95, %v156
  %v185 = vadd.f32 %v96, %v157
  %v186 = vadd.f32 %v97, %v158
  %v187 = vadd.f32 %v98, %v159
  %v188 = vadd.f32 %v99, %v160
  %v189 = vadd.f32 %v100, %v161
  %v190 = vadd.f32 %v101, %v162
  %v191 = vadd.f32 %v102, %v163
  %v192 = vadd.f32 %v103, %v164
  %v193 = vadd.f32 %v104, %v165
  %v194 = vadd.f32 %v105, %v166
  %v195 = vadd.f32 %v106, %v167
  %v196 = vadd.f32 %v107, %v168
  %v197 = vadd.f32 %v108, %v169
  %v198 = vadd.f32 %v109, %v170
  %v199 = vld [vmem:[%s0 + $0x2] sm:$0xff]
  %v200 = vld [vmem:[%s0 + $0xa] sm:$0x3f]
  %v201 = vld [vmem:[%s0 + $0x12] sm:$0xff]
  %v202 = vld [vmem:[%s0 + $0x1a] sm:$0x3f]
  %v203 = vld [vmem:[%s0 + $0x22] sm:$0xff]
  %v204 = vld [vmem:[%s0 + $0x2a] sm:$0x3f]
  %v205 = vld [vmem:[%s0 + $0x32] sm:$0xff]
  %v206 = vld [vmem:[%s0 + $0x3a] sm:$0x3f]
  %v207 = vld [vmem:[%s0 + $0x42] sm:$0xff]
  %v208 = vld [vmem:[%s0 + $0x4a] sm:$0x3f]
  %v209 = vld [vmem:[%s0 + $0x52] sm:$0xff]
  %v210 = vld [vmem:[%s0 + $0x5a] sm:$0x3f]
  %v211 = vld [vmem:[%s0 + $0x62] sm:$0xff]
  %v212 = vld [vmem:[%s0 + $0x6a] sm:$0x3f]
  %v213 = vld [vmem:[%s0 + $0x72] sm:$0xff]
  %v214 = vld [vmem:[%s0 + $0x7a] sm:$0x3f]
  %v215 = vld [vmem:[%s0 + $0x82] sm:$0xff]
  %v216 = vld [vmem:[%s0 + $0x8a] sm:$0x3f]
  %v217 = vld [vmem:[%s0 + $0x92] sm:$0xff]
  %v218 = vld [vmem:[%s0 + $0x9a] sm:$0x3f]
  %v219 = vld [vmem:[%s0 + $0xa2] sm:$0xff]
  %v220 = vld [vmem:[%s0 + $0xaa] sm:$0x3f]
  %v221 = vld [vmem:[%s0 + $0xb2] sm:$0xff]
  %v222 = vld [vmem:[%s0 + $0xba] sm:$0x3f]
  %v223 = vld [vmem:[%s0 + $0xc2] sm:$0xff]
  %v224 = vld [vmem:[%s0 + $0xca] sm:$0x3f]
  %v225 = vld [vmem:[%s0 + $0xd2] sm:$0xff]
  %v226 = vld [vmem:[%s0 + $0xda] sm:$0x3f]
  %v227 = vld [vmem:[%s1 + $0x2] sm:$0x1]
  %v228 = vlaneseq
  %v229 = vshrl.u32 %v228, 7
  %v230 = vsub.s32 0, %v229
  %v231 = vrot.slane %v227, %v230
  %v232 = vmul.f32 %v199, %v231
  %v233 = vmul.f32 %v200, %v231
  %v234 = vmul.f32 %v201, %v231
  %v235 = vmul.f32 %v202, %v231
  %v236 = vmul.f32 %v203, %v231
  %v237 = vmul.f32 %v204, %v231
  %v238 = vmul.f32 %v205, %v231
  %v239 = vmul.f32 %v206, %v231
  %v240 = vmul.f32 %v207, %v231
  %v241 = vmul.f32 %v208, %v231
  %v242 = vmul.f32 %v209, %v231
  %v243 = vmul.f32 %v210, %v231
  %v244 = vmul.f32 %v211, %v231
  %v245 = vmul.f32 %v212, %v231
  %v246 = vmul.f32 %v213, %v231
  %v247 = vmul.f32 %v214, %v231
  %v248 = vmul.f32 %v215, %v231
  %v249 = vmul.f32 %v216, %v231
  %v250 = vmul.f32 %v217, %v231
  %v251 = vmul.f32 %v218, %v231
  %v252 = vmul.f32 %v219, %v231
  %v253 = vmul.f32 %v220, %v231
  %v254 = vmul.f32 %v221, %v231
  %v255 = vmul.f32 %v222, %v231
  %v256 = vmul.f32 %v223, %v231
  %v257 = vmul.f32 %v224, %v231
  %v258 = vmul.f32 %v225, %v231
  %v259 = vmul.f32 %v226, %v231
  %v260 = vadd.f32 %v171, %v232
  %v261 = vadd.f32 %v172, %v233
  %v262 = vadd.f32 %v173, %v234
  %v263 = vadd.f32 %v174, %v235
  %v264 = vadd.f32 %v175, %v236
  %v265 = vadd.f32 %v176, %v237
  %v266 = vadd.f32 %v177, %v238
  %v267 = vadd.f32 %v178, %v239
  %v268 = vadd.f32 %v179, %v240
  %v269 = vadd.f32 %v180, %v241
  %v270 = vadd.f32 %v181, %v242
  %v271 = vadd.f32 %v182, %v243
  %v272 = vadd.f32 %v183, %v244
  %v273 = vadd.f32 %v184, %v245
  %v274 = vadd.f32 %v185, %v246
  %v275 = vadd.f32 %v186, %v247
  %v276 = vadd.f32 %v187, %v248
  %v277 = vadd.f32 %v188, %v249
  %v278 = vadd.f32 %v189, %v250
  %v279 = vadd.f32 %v190, %v251
  %v280 = vadd.f32 %v191, %v252
  %v281 = vadd.f32 %v192, %v253
  %v282 = vadd.f32 %v193, %v254
  %v283 = vadd.f32 %v194, %v255
  %v284 = vadd.f32 %v195, %v256
  %v285 = vadd.f32 %v196, %v257
  %v286 = vadd.f32 %v197, %v258
  %v287 = vadd.f32 %v198, %v259
  %s288 = scalar_lea.vmem %s0, 16
  %v289 = vld [vmem:[%s288] sm:$0xff]
  %v290 = vld [vmem:[%s288 + $0x8] sm:$0x3f]
  %v291 = vld [vmem:[%s288 + $0x10] sm:$0xff]
  %v292 = vld [vmem:[%s288 + $0x18] sm:$0x3f]
  %v293 = vld [vmem:[%s288 + $0x20] sm:$0xff]
  %v294 = vld [vmem:[%s288 + $0x28] sm:$0x3f]
  %v295 = vld [vmem:[%s288 + $0x30] sm:$0xff]
  %v296 = vld [vmem:[%s288 + $0x38] sm:$0x3f]
  %v297 = vld [vmem:[%s288 + $0x40] sm:$0xff]
  %v298 = vld [vmem:[%s288 + $0x48] sm:$0x3f]
  %v299 = vld [vmem:[%s288 + $0x50] sm:$0xff]
  %v300 = vld [vmem:[%s288 + $0x58] sm:$0x3f]
  %v301 = vld [vmem:[%s288 + $0x60] sm:$0xff]
  %v302 = vld [vmem:[%s288 + $0x68] sm:$0x3f]
  %v303 = vld [vmem:[%s288 + $0x70] sm:$0xff]
  %v304 = vld [vmem:[%s288 + $0x78] sm:$0x3f]
  %v305 = vld [vmem:[%s288 + $0x80] sm:$0xff]
  %v306 = vld [vmem:[%s288 + $0x88] sm:$0x3f]
  %v307 = vld [vmem:[%s288 + $0x90] sm:$0xff]
  %v308 = vld [vmem:[%s288 + $0x98] sm:$0x3f]
  %v309 = vld [vmem:[%s288 + $0xa0] sm:$0xff]
  %v310 = vld [vmem:[%s288 + $0xa8] sm:$0x3f]
  %v311 = vld [vmem:[%s288 + $0xb0] sm:$0xff]
  %v312 = vld [vmem:[%s288 + $0xb8] sm:$0x3f]
  %v313 = vld [vmem:[%s288 + $0xc0] sm:$0xff]
  %v314 = vld [vmem:[%s288 + $0xc8] sm:$0x3f]
  %v315 = vld [vmem:[%s288 + $0xd0] sm:$0xff]
  %v316 = vld [vmem:[%s288 + $0xd8] sm:$0x3f]
  %v317 = vld [vmem:[%s1 + $0x3] sm:$0x1]
  %v318 = vlaneseq
  %v319 = vshrl.u32 %v318, 7
  %v320 = vsub.s32 0, %v319
  %v321 = vrot.slane %v317, %v320
  %v322 = vmul.f32 %v289, %v321
  %v323 = vmul.f32 %v290, %v321
  %v324 = vmul.f32 %v291, %v321
  %v325 = vmul.f32 %v292, %v321
  %v326 = vmul.f32 %v293, %v321
  %v327 = vmul.f32 %v294, %v321
  %v328 = vmul.f32 %v295, %v321
  %v329 = vmul.f32 %v296, %v321
  %v330 = vmul.f32 %v297, %v321
  %v331 = vmul.f32 %v298, %v321
  %v332 = vmul.f32 %v299, %v321
  %v333 = vmul.f32 %v300, %v321
  %v334 = vmul.f32 %v301, %v321
  %v335 = vmul.f32 %v302, %v321
  %v336 = vmul.f32 %v303, %v321
  %v337 = vmul.f32 %v304, %v321
  %v338 = vmul.f32 %v305, %v321
  %v339 = vmul.f32 %v306, %v321
  %v340 = vmul.f32 %v307, %v321
  %v341 = vmul.f32 %v308, %v321
  %v342 = vmul.f32 %v309, %v321
  %v343 = vmul.f32 %v310, %v321
  %v344 = vmul.f32 %v311, %v321
  %v345 = vmul.f32 %v312, %v321
  %v346 = vmul.f32 %v313, %v321
  %v347 = vmul.f32 %v314, %v321
  %v348 = vmul.f32 %v315, %v321
  %v349 = vmul.f32 %v316, %v321
  %v350 = vadd.f32 %v260, %v322
  %v351 = vadd.f32 %v261, %v323
  %v352 = vadd.f32 %v262, %v324
  %v353 = vadd.f32 %v263, %v325
  %v354 = vadd.f32 %v264, %v326
  %v355 = vadd.f32 %v265, %v327
  %v356 = vadd.f32 %v266, %v328
  %v357 = vadd.f32 %v267, %v329
  %v358 = vadd.f32 %v268, %v330
  %v359 = vadd.f32 %v269, %v331
  %v360 = vadd.f32 %v270, %v332
  %v361 = vadd.f32 %v271, %v333
  %v362 = vadd.f32 %v272, %v334
  %v363 = vadd.f32 %v273, %v335
  %v364 = vadd.f32 %v274, %v336
  %v365 = vadd.f32 %v275, %v337
  %v366 = vadd.f32 %v276, %v338
  %v367 = vadd.f32 %v277, %v339
  %v368 = vadd.f32 %v278, %v340
  %v369 = vadd.f32 %v279, %v341
  %v370 = vadd.f32 %v280, %v342
  %v371 = vadd.f32 %v281, %v343
  %v372 = vadd.f32 %v282, %v344
  %v373 = vadd.f32 %v283, %v345
  %v374 = vadd.f32 %v284, %v346
  %v375 = vadd.f32 %v285, %v347
  %v376 = vadd.f32 %v286, %v348
  %v377 = vadd.f32 %v287, %v349
  %v378 = vld [vmem:[%s288 + $0x1] sm:$0xff]
  %v379 = vld [vmem:[%s288 + $0x9] sm:$0x3f]
  %v380 = vld [vmem:[%s288 + $0x11] sm:$0xff]
  %v381 = vld [vmem:[%s288 + $0x19] sm:$0x3f]
  %v382 = vld [vmem:[%s288 + $0x21] sm:$0xff]
  %v383 = vld [vmem:[%s288 + $0x29] sm:$0x3f]
  %v384 = vld [vmem:[%s288 + $0x31] sm:$0xff]
  %v385 = vld [vmem:[%s288 + $0x39] sm:$0x3f]
  %v386 = vld [vmem:[%s288 + $0x41] sm:$0xff]
  %v387 = vld [vmem:[%s288 + $0x49] sm:$0x3f]
  %v388 = vld [vmem:[%s288 + $0x51] sm:$0xff]
  %v389 = vld [vmem:[%s288 + $0x59] sm:$0x3f]
  %v390 = vld [vmem:[%s288 + $0x61] sm:$0xff]
  %v391 = vld [vmem:[%s288 + $0x69] sm:$0x3f]
  %v392 = vld [vmem:[%s288 + $0x71] sm:$0xff]
  %v393 = vld [vmem:[%s288 + $0x79] sm:$0x3f]
  %v394 = vld [vmem:[%s288 + $0x81] sm:$0xff]
  %v395 = vld [vmem:[%s288 + $0x89] sm:$0x3f]
  %v396 = vld [vmem:[%s288 + $0x91] sm:$0xff]
  %v397 = vld [vmem:[%s288 + $0x99] sm:$0x3f]
  %v398 = vld [vmem:[%s288 + $0xa1] sm:$0xff]
  %v399 = vld [vmem:[%s288 + $0xa9] sm:$0x3f]
  %v400 = vld [vmem:[%s288 + $0xb1] sm:$0xff]
  %v401 = vld [vmem:[%s288 + $0xb9] sm:$0x3f]
  %v402 = vld [vmem:[%s288 + $0xc1] sm:$0xff]
  %v403 = vld [vmem:[%s288 + $0xc9] sm:$0x3f]
  %v404 = vld [vmem:[%s288 + $0xd1] sm:$0xff]
  %v405 = vld [vmem:[%s288 + $0xd9] sm:$0x3f]
  %v406 = vld [vmem:[%s1 + $0x4] sm:$0x1]
  %v407 = vlaneseq
  %v408 = vshrl.u32 %v407, 7
  %v409 = vsub.s32 0, %v408
  %v410 = vrot.slane %v406, %v409
  %v411 = vmul.f32 %v378, %v410
  %v412 = vmul.f32 %v379, %v410
  %v413 = vmul.f32 %v380, %v410
  %v414 = vmul.f32 %v381, %v410
  %v415 = vmul.f32 %v382, %v410
  %v416 = vmul.f32 %v383, %v410
  %v417 = vmul.f32 %v384, %v410
  %v418 = vmul.f32 %v385, %v410
  %v419 = vmul.f32 %v386, %v410
  %v420 = vmul.f32 %v387, %v410
  %v421 = vmul.f32 %v388, %v410
  %v422 = vmul.f32 %v389, %v410
  %v423 = vmul.f32 %v390, %v410
  %v424 = vmul.f32 %v391, %v410
  %v425 = vmul.f32 %v392, %v410
  %v426 = vmul.f32 %v393, %v410
  %v427 = vmul.f32 %v394, %v410
  %v428 = vmul.f32 %v395, %v410
  %v429 = vmul.f32 %v396, %v410
  %v430 = vmul.f32 %v397, %v410
  %v431 = vmul.f32 %v398, %v410
  %v432 = vmul.f32 %v399, %v410
  %v433 = vmul.f32 %v400, %v410
  %v434 = vmul.f32 %v401, %v410
  %v435 = vmul.f32 %v402, %v410
  %v436 = vmul.f32 %v403, %v410
  %v437 = vmul.f32 %v404, %v410
  %v438 = vmul.f32 %v405, %v410
  %v439 = vadd.f32 %v350, %v411
  %v440 = vadd.f32 %v351, %v412
  %v441 = vadd.f32 %v352, %v413
  %v442 = vadd.f32 %v353, %v414
  %v443 = vadd.f32 %v354, %v415
  %v444 = vadd.f32 %v355, %v416
  %v445 = vadd.f32 %v356, %v417
  %v446 = vadd.f32 %v357, %v418
  %v447 = vadd.f32 %v358, %v419
  %v448 = vadd.f32 %v359, %v420
  %v449 = vadd.f32 %v360, %v421
  %v450 = vadd.f32 %v361, %v422
  %v451 = vadd.f32 %v362, %v423
  %v452 = vadd.f32 %v363, %v424
  %v453 = vadd.f32 %v364, %v425
  %v454 = vadd.f32 %v365, %v426
  %v455 = vadd.f32 %v366, %v427
  %v456 = vadd.f32 %v367, %v428
  %v457 = vadd.f32 %v368, %v429
  %v458 = vadd.f32 %v369, %v430
  %v459 = vadd.f32 %v370, %v431
  %v460 = vadd.f32 %v371, %v432
  %v461 = vadd.f32 %v372, %v433
  %v462 = vadd.f32 %v373, %v434
  %v463 = vadd.f32 %v374, %v435
  %v464 = vadd.f32 %v375, %v436
  %v465 = vadd.f32 %v376, %v437
  %v466 = vadd.f32 %v377, %v438
  %v467 = vld [vmem:[%s288 + $0x2] sm:$0xff]
  %v468 = vld [vmem:[%s288 + $0xa] sm:$0x3f]
  %v469 = vld [vmem:[%s288 + $0x12] sm:$0xff]
  %v470 = vld [vmem:[%s288 + $0x1a] sm:$0x3f]
  %v471 = vld [vmem:[%s288 + $0x22] sm:$0xff]
  %v472 = vld [vmem:[%s288 + $0x2a] sm:$0x3f]
  %v473 = vld [vmem:[%s288 + $0x32] sm:$0xff]
  %v474 = vld [vmem:[%s288 + $0x3a] sm:$0x3f]
  %v475 = vld [vmem:[%s288 + $0x42] sm:$0xff]
  %v476 = vld [vmem:[%s288 + $0x4a] sm:$0x3f]
  %v477 = vld [vmem:[%s288 + $0x52] sm:$0xff]
  %v478 = vld [vmem:[%s288 + $0x5a] sm:$0x3f]
  %v479 = vld [vmem:[%s288 + $0x62] sm:$0xff]
  %v480 = vld [vmem:[%s288 + $0x6a] sm:$0x3f]
  %v481 = vld [vmem:[%s288 + $0x72] sm:$0xff]
  %v482 = vld [vmem:[%s288 + $0x7a] sm:$0x3f]
  %v483 = vld [vmem:[%s288 + $0x82] sm:$0xff]
  %v484 = vld [vmem:[%s288 + $0x8a] sm:$0x3f]
  %v485 = vld [vmem:[%s288 + $0x92] sm:$0xff]
  %v486 = vld [vmem:[%s288 + $0x9a] sm:$0x3f]
  %v487 = vld [vmem:[%s288 + $0xa2] sm:$0xff]
  %v488 = vld [vmem:[%s288 + $0xaa] sm:$0x3f]
  %v489 = vld [vmem:[%s288 + $0xb2] sm:$0xff]
  %v490 = vld [vmem:[%s288 + $0xba] sm:$0x3f]
  %v491 = vld [vmem:[%s288 + $0xc2] sm:$0xff]
  %v492 = vld [vmem:[%s288 + $0xca] sm:$0x3f]
  %v493 = vld [vmem:[%s288 + $0xd2] sm:$0xff]
  %v494 = vld [vmem:[%s288 + $0xda] sm:$0x3f]
  %v495 = vld [vmem:[%s1 + $0x5] sm:$0x1]
  %v496 = vlaneseq
  %v497 = vshrl.u32 %v496, 7
  %v498 = vsub.s32 0, %v497
  %v499 = vrot.slane %v495, %v498
  %v500 = vmul.f32 %v467, %v499
  %v501 = vmul.f32 %v468, %v499
  %v502 = vmul.f32 %v469, %v499
  %v503 = vmul.f32 %v470, %v499
  %v504 = vmul.f32 %v471, %v499
  %v505 = vmul.f32 %v472, %v499
  %v506 = vmul.f32 %v473, %v499
  %v507 = vmul.f32 %v474, %v499
  %v508 = vmul.f32 %v475, %v499
  %v509 = vmul.f32 %v476, %v499
  %v510 = vmul.f32 %v477, %v499
  %v511 = vmul.f32 %v478, %v499
  %v512 = vmul.f32 %v479, %v499
  %v513 = vmul.f32 %v480, %v499
  %v514 = vmul.f32 %v481, %v499
  %v515 = vmul.f32 %v482, %v499
  %v516 = vmul.f32 %v483, %v499
  %v517 = vmul.f32 %v484, %v499
  %v518 = vmul.f32 %v485, %v499
  %v519 = vmul.f32 %v486, %v499
  %v520 = vmul.f32 %v487, %v499
  %v521 = vmul.f32 %v488, %v499
  %v522 = vmul.f32 %v489, %v499
  %v523 = vmul.f32 %v490, %v499
  %v524 = vmul.f32 %v491, %v499
  %v525 = vmul.f32 %v492, %v499
  %v526 = vmul.f32 %v493, %v499
  %v527 = vmul.f32 %v494, %v499
  %v528 = vadd.f32 %v439, %v500
  %v529 = vadd.f32 %v440, %v501
  %v530 = vadd.f32 %v441, %v502
  %v531 = vadd.f32 %v442, %v503
  %v532 = vadd.f32 %v443, %v504
  %v533 = vadd.f32 %v444, %v505
  %v534 = vadd.f32 %v445, %v506
  %v535 = vadd.f32 %v446, %v507
  %v536 = vadd.f32 %v447, %v508
  %v537 = vadd.f32 %v448, %v509
  %v538 = vadd.f32 %v449, %v510
  %v539 = vadd.f32 %v450, %v511
  %v540 = vadd.f32 %v451, %v512
  %v541 = vadd.f32 %v452, %v513
  %v542 = vadd.f32 %v453, %v514
  %v543 = vadd.f32 %v454, %v515
  %v544 = vadd.f32 %v455, %v516
  %v545 = vadd.f32 %v456, %v517
  %v546 = vadd.f32 %v457, %v518
  %v547 = vadd.f32 %v458, %v519
  %v548 = vadd.f32 %v459, %v520
  %v549 = vadd.f32 %v460, %v521
  %v550 = vadd.f32 %v461, %v522
  %v551 = vadd.f32 %v462, %v523
  %v552 = vadd.f32 %v463, %v524
  %v553 = vadd.f32 %v464, %v525
  %v554 = vadd.f32 %v465, %v526
  %v555 = vadd.f32 %v466, %v527
  %s556 = scalar_lea.vmem %s0, 32
  %v557 = vld [vmem:[%s556] sm:$0xff]
  %v558 = vld [vmem:[%s556 + $0x8] sm:$0x3f]
  %v559 = vld [vmem:[%s556 + $0x10] sm:$0xff]
  %v560 = vld [vmem:[%s556 + $0x18] sm:$0x3f]
  %v561 = vld [vmem:[%s556 + $0x20] sm:$0xff]
  %v562 = vld [vmem:[%s556 + $0x28] sm:$0x3f]
  %v563 = vld [vmem:[%s556 + $0x30] sm:$0xff]
  %v564 = vld [vmem:[%s556 + $0x38] sm:$0x3f]
  %v565 = vld [vmem:[%s556 + $0x40] sm:$0xff]
  %v566 = vld [vmem:[%s556 + $0x48] sm:$0x3f]
  %v567 = vld [vmem:[%s556 + $0x50] sm:$0xff]
  %v568 = vld [vmem:[%s556 + $0x58] sm:$0x3f]
  %v569 = vld [vmem:[%s556 + $0x60] sm:$0xff]
  %v570 = vld [vmem:[%s556 + $0x68] sm:$0x3f]
  %v571 = vld [vmem:[%s556 + $0x70] sm:$0xff]
  %v572 = vld [vmem:[%s556 + $0x78] sm:$0x3f]
  %v573 = vld [vmem:[%s556 + $0x80] sm:$0xff]
  %v574 = vld [vmem:[%s556 + $0x88] sm:$0x3f]
  %v575 = vld [vmem:[%s556 + $0x90] sm:$0xff]
  %v576 = vld [vmem:[%s556 + $0x98] sm:$0x3f]
  %v577 = vld [vmem:[%s556 + $0xa0] sm:$0xff]
  %v578 = vld [vmem:[%s556 + $0xa8] sm:$0x3f]
  %v579 = vld [vmem:[%s556 + $0xb0] sm:$0xff]
  %v580 = vld [vmem:[%s556 + $0xb8] sm:$0x3f]
  %v581 = vld [vmem:[%s556 + $0xc0] sm:$0xff]
  %v582 = vld [vmem:[%s556 + $0xc8] sm:$0x3f]
  %v583 = vld [vmem:[%s556 + $0xd0] sm:$0xff]
  %v584 = vld [vmem:[%s556 + $0xd8] sm:$0x3f]
  %v585 = vld [vmem:[%s1 + $0x6] sm:$0x1]
  %v586 = vlaneseq
  %v587 = vshrl.u32 %v586, 7
  %v588 = vsub.s32 0, %v587
  %v589 = vrot.slane %v585, %v588
  %v590 = vmul.f32 %v557, %v589
  %v591 = vmul.f32 %v558, %v589
  %v592 = vmul.f32 %v559, %v589
  %v593 = vmul.f32 %v560, %v589
  %v594 = vmul.f32 %v561, %v589
  %v595 = vmul.f32 %v562, %v589
  %v596 = vmul.f32 %v563, %v589
  %v597 = vmul.f32 %v564, %v589
  %v598 = vmul.f32 %v565, %v589
  %v599 = vmul.f32 %v566, %v589
  %v600 = vmul.f32 %v567, %v589
  %v601 = vmul.f32 %v568, %v589
  %v602 = vmul.f32 %v569, %v589
  %v603 = vmul.f32 %v570, %v589
  %v604 = vmul.f32 %v571, %v589
  %v605 = vmul.f32 %v572, %v589
  %v606 = vmul.f32 %v573, %v589
  %v607 = vmul.f32 %v574, %v589
  %v608 = vmul.f32 %v575, %v589
  %v609 = vmul.f32 %v576, %v589
  %v610 = vmul.f32 %v577, %v589
  %v611 = vmul.f32 %v578, %v589
  %v612 = vmul.f32 %v579, %v589
  %v613 = vmul.f32 %v580, %v589
  %v614 = vmul.f32 %v581, %v589
  %v615 = vmul.f32 %v582, %v589
  %v616 = vmul.f32 %v583, %v589
  %v617 = vmul.f32 %v584, %v589
  %v618 = vadd.f32 %v528, %v590
  %v619 = vadd.f32 %v529, %v591
  %v620 = vadd.f32 %v530, %v592
  %v621 = vadd.f32 %v531, %v593
  %v622 = vadd.f32 %v532, %v594
  %v623 = vadd.f32 %v533, %v595
  %v624 = vadd.f32 %v534, %v596
  %v625 = vadd.f32 %v535, %v597
  %v626 = vadd.f32 %v536, %v598
  %v627 = vadd.f32 %v537, %v599
  %v628 = vadd.f32 %v538, %v600
  %v629 = vadd.f32 %v539, %v601
  %v630 = vadd.f32 %v540, %v602
  %v631 = vadd.f32 %v541, %v603
  %v632 = vadd.f32 %v542, %v604
  %v633 = vadd.f32 %v543, %v605
  %v634 = vadd.f32 %v544, %v606
  %v635 = vadd.f32 %v545, %v607
  %v636 = vadd.f32 %v546, %v608
  %v637 = vadd.f32 %v547, %v609
  %v638 = vadd.f32 %v548, %v610
  %v639 = vadd.f32 %v549, %v611
  %v640 = vadd.f32 %v550, %v612
  %v641 = vadd.f32 %v551, %v613
  %v642 = vadd.f32 %v552, %v614
  %v643 = vadd.f32 %v553, %v615
  %v644 = vadd.f32 %v554, %v616
  %v645 = vadd.f32 %v555, %v617
  %v646 = vld [vmem:[%s556 + $0x1] sm:$0xff]
  %v647 = vld [vmem:[%s556 + $0x9] sm:$0x3f]
  %v648 = vld [vmem:[%s556 + $0x11] sm:$0xff]
  %v649 = vld [vmem:[%s556 + $0x19] sm:$0x3f]
  %v650 = vld [vmem:[%s556 + $0x21] sm:$0xff]
  %v651 = vld [vmem:[%s556 + $0x29] sm:$0x3f]
  %v652 = vld [vmem:[%s556 + $0x31] sm:$0xff]
  %v653 = vld [vmem:[%s556 + $0x39] sm:$0x3f]
  %v654 = vld [vmem:[%s556 + $0x41] sm:$0xff]
  %v655 = vld [vmem:[%s556 + $0x49] sm:$0x3f]
  %v656 = vld [vmem:[%s556 + $0x51] sm:$0xff]
  %v657 = vld [vmem:[%s556 + $0x59] sm:$0x3f]
  %v658 = vld [vmem:[%s556 + $0x61] sm:$0xff]
  %v659 = vld [vmem:[%s556 + $0x69] sm:$0x3f]
  %v660 = vld [vmem:[%s556 + $0x71] sm:$0xff]
  %v661 = vld [vmem:[%s556 + $0x79] sm:$0x3f]
  %v662 = vld [vmem:[%s556 + $0x81] sm:$0xff]
  %v663 = vld [vmem:[%s556 + $0x89] sm:$0x3f]
  %v664 = vld [vmem:[%s556 + $0x91] sm:$0xff]
  %v665 = vld [vmem:[%s556 + $0x99] sm:$0x3f]
  %v666 = vld [vmem:[%s556 + $0xa1] sm:$0xff]
  %v667 = vld [vmem:[%s556 + $0xa9] sm:$0x3f]
  %v668 = vld [vmem:[%s556 + $0xb1] sm:$0xff]
  %v669 = vld [vmem:[%s556 + $0xb9] sm:$0x3f]
  %v670 = vld [vmem:[%s556 + $0xc1] sm:$0xff]
  %v671 = vld [vmem:[%s556 + $0xc9] sm:$0x3f]
  %v672 = vld [vmem:[%s556 + $0xd1] sm:$0xff]
  %v673 = vld [vmem:[%s556 + $0xd9] sm:$0x3f]
  %v674 = vld [vmem:[%s1 + $0x7] sm:$0x1]
  %v675 = vlaneseq
  %v676 = vshrl.u32 %v675, 7
  %v677 = vsub.s32 0, %v676
  %v678 = vrot.slane %v674, %v677
  %v679 = vmul.f32 %v646, %v678
  %v680 = vmul.f32 %v647, %v678
  %v681 = vmul.f32 %v648, %v678
  %v682 = vmul.f32 %v649, %v678
  %v683 = vmul.f32 %v650, %v678
  %v684 = vmul.f32 %v651, %v678
  %v685 = vmul.f32 %v652, %v678
  %v686 = vmul.f32 %v653, %v678
  %v687 = vmul.f32 %v654, %v678
  %v688 = vmul.f32 %v655, %v678
  %v689 = vmul.f32 %v656, %v678
  %v690 = vmul.f32 %v657, %v678
  %v691 = vmul.f32 %v658, %v678
  %v692 = vmul.f32 %v659, %v678
  %v693 = vmul.f32 %v660, %v678
  %v694 = vmul.f32 %v661, %v678
  %v695 = vmul.f32 %v662, %v678
  %v696 = vmul.f32 %v663, %v678
  %v697 = vmul.f32 %v664, %v678
  %v698 = vmul.f32 %v665, %v678
  %v699 = vmul.f32 %v666, %v678
  %v700 = vmul.f32 %v667, %v678
  %v701 = vmul.f32 %v668, %v678
  %v702 = vmul.f32 %v669, %v678
  %v703 = vmul.f32 %v670, %v678
  %v704 = vmul.f32 %v671, %v678
  %v705 = vmul.f32 %v672, %v678
  %v706 = vmul.f32 %v673, %v678
  %v707 = vadd.f32 %v618, %v679
  %v708 = vadd.f32 %v619, %v680
  %v709 = vadd.f32 %v620, %v681
  %v710 = vadd.f32 %v621, %v682
  %v711 = vadd.f32 %v622, %v683
  %v712 = vadd.f32 %v623, %v684
  %v713 = vadd.f32 %v624, %v685
  %v714 = vadd.f32 %v625, %v686
  %v715 = vadd.f32 %v626, %v687
  %v716 = vadd.f32 %v627, %v688
  %v717 = vadd.f32 %v628, %v689
  %v718 = vadd.f32 %v629, %v690
  %v719 = vadd.f32 %v630, %v691
  %v720 = vadd.f32 %v631, %v692
  %v721 = vadd.f32 %v632, %v693
  %v722 = vadd.f32 %v633, %v694
  %v723 = vadd.f32 %v634, %v695
  %v724 = vadd.f32 %v635, %v696
  %v725 = vadd.f32 %v636, %v697
  %v726 = vadd.f32 %v637, %v698
  %v727 = vadd.f32 %v638, %v699
  %v728 = vadd.f32 %v639, %v700
  %v729 = vadd.f32 %v640, %v701
  %v730 = vadd.f32 %v641, %v702
  %v731 = vadd.f32 %v642, %v703
  %v732 = vadd.f32 %v643, %v704
  %v733 = vadd.f32 %v644, %v705
  %v734 = vadd.f32 %v645, %v706
  %v735 = vld [vmem:[%s556 + $0x2] sm:$0xff]
  %v736 = vld [vmem:[%s556 + $0xa] sm:$0x3f]
  %v737 = vld [vmem:[%s556 + $0x12] sm:$0xff]
  %v738 = vld [vmem:[%s556 + $0x1a] sm:$0x3f]
  %v739 = vld [vmem:[%s556 + $0x22] sm:$0xff]
  %v740 = vld [vmem:[%s556 + $0x2a] sm:$0x3f]
  %v741 = vld [vmem:[%s556 + $0x32] sm:$0xff]
  %v742 = vld [vmem:[%s556 + $0x3a] sm:$0x3f]
  %v743 = vld [vmem:[%s556 + $0x42] sm:$0xff]
  %v744 = vld [vmem:[%s556 + $0x4a] sm:$0x3f]
  %v745 = vld [vmem:[%s556 + $0x52] sm:$0xff]
  %v746 = vld [vmem:[%s556 + $0x5a] sm:$0x3f]
  %v747 = vld [vmem:[%s556 + $0x62] sm:$0xff]
  %v748 = vld [vmem:[%s556 + $0x6a] sm:$0x3f]
  %v749 = vld [vmem:[%s556 + $0x72] sm:$0xff]
  %v750 = vld [vmem:[%s556 + $0x7a] sm:$0x3f]
  %v751 = vld [vmem:[%s556 + $0x82] sm:$0xff]
  %v752 = vld [vmem:[%s556 + $0x8a] sm:$0x3f]
  %v753 = vld [vmem:[%s556 + $0x92] sm:$0xff]
  %v754 = vld [vmem:[%s556 + $0x9a] sm:$0x3f]
  %v755 = vld [vmem:[%s556 + $0xa2] sm:$0xff]
  %v756 = vld [vmem:[%s556 + $0xaa] sm:$0x3f]
  %v757 = vld [vmem:[%s556 + $0xb2] sm:$0xff]
  %v758 = vld [vmem:[%s556 + $0xba] sm:$0x3f]
  %v759 = vld [vmem:[%s556 + $0xc2] sm:$0xff]
  %v760 = vld [vmem:[%s556 + $0xca] sm:$0x3f]
  %v761 = vld [vmem:[%s556 + $0xd2] sm:$0xff]
  %v762 = vld [vmem:[%s556 + $0xda] sm:$0x3f]
  %v763 = vld [vmem:[%s1 + $0x8] sm:$0x1]
  %v764 = vlaneseq
  %v765 = vshrl.u32 %v764, 7
  %v766 = vsub.s32 0, %v765
  %v767 = vrot.slane %v763, %v766
  %v768 = vmul.f32 %v735, %v767
  %v769 = vmul.f32 %v736, %v767
  %v770 = vmul.f32 %v737, %v767
  %v771 = vmul.f32 %v738, %v767
  %v772 = vmul.f32 %v739, %v767
  %v773 = vmul.f32 %v740, %v767
  %v774 = vmul.f32 %v741, %v767
  %v775 = vmul.f32 %v742, %v767
  %v776 = vmul.f32 %v743, %v767
  %v777 = vmul.f32 %v744, %v767
  %v778 = vmul.f32 %v745, %v767
  %v779 = vmul.f32 %v746, %v767
  %v780 = vmul.f32 %v747, %v767
  %v781 = vmul.f32 %v748, %v767
  %v782 = vmul.f32 %v749, %v767
  %v783 = vmul.f32 %v750, %v767
  %v784 = vmul.f32 %v751, %v767
  %v785 = vmul.f32 %v752, %v767
  %v786 = vmul.f32 %v753, %v767
  %v787 = vmul.f32 %v754, %v767
  %v788 = vmul.f32 %v755, %v767
  %v789 = vmul.f32 %v756, %v767
  %v790 = vmul.f32 %v757, %v767
  %v791 = vmul.f32 %v758, %v767
  %v792 = vmul.f32 %v759, %v767
  %v793 = vmul.f32 %v760, %v767
  %v794 = vmul.f32 %v761, %v767
  %v795 = vmul.f32 %v762, %v767
  %v796 = vadd.f32 %v707, %v768
  %v797 = vadd.f32 %v708, %v769
  %v798 = vadd.f32 %v709, %v770
  %v799 = vadd.f32 %v710, %v771
  %v800 = vadd.f32 %v711, %v772
  %v801 = vadd.f32 %v712, %v773
  %v802 = vadd.f32 %v713, %v774
  %v803 = vadd.f32 %v714, %v775
  %v804 = vadd.f32 %v715, %v776
  %v805 = vadd.f32 %v716, %v777
  %v806 = vadd.f32 %v717, %v778
  %v807 = vadd.f32 %v718, %v779
  %v808 = vadd.f32 %v719, %v780
  %v809 = vadd.f32 %v720, %v781
  %v810 = vadd.f32 %v721, %v782
  %v811 = vadd.f32 %v722, %v783
  %v812 = vadd.f32 %v723, %v784
  %v813 = vadd.f32 %v724, %v785
  %v814 = vadd.f32 %v725, %v786
  %v815 = vadd.f32 %v726, %v787
  %v816 = vadd.f32 %v727, %v788
  %v817 = vadd.f32 %v728, %v789
  %v818 = vadd.f32 %v729, %v790
  %v819 = vadd.f32 %v730, %v791
  %v820 = vadd.f32 %v731, %v792
  %v821 = vadd.f32 %v732, %v793
  %v822 = vadd.f32 %v733, %v794
  %v823 = vadd.f32 %v734, %v795
  %v824 = vld [vmem:[%s2] sm:$0x1]
  %v826 = vlaneseq
  %v827 = vshrl.u32 %v826, 7
  %v828 = vsub.s32 0, %v827
  %v829 = vrot.slane %v824, %v828
  %v831 = vadd.f32 %v796, %v829
  %v832 = vadd.f32 %v797, %v829
  %v833 = vadd.f32 %v798, %v829
  %v834 = vadd.f32 %v799, %v829
  %v835 = vadd.f32 %v800, %v829
  %v836 = vadd.f32 %v801, %v829
  %v837 = vadd.f32 %v802, %v829
  %v838 = vadd.f32 %v803, %v829
  %v839 = vadd.f32 %v804, %v829
  %v840 = vadd.f32 %v805, %v829
  %v841 = vadd.f32 %v806, %v829
  %v842 = vadd.f32 %v807, %v829
  %v843 = vadd.f32 %v808, %v829
  %v844 = vadd.f32 %v809, %v829
  %v845 = vadd.f32 %v810, %v829
  %v846 = vadd.f32 %v811, %v829
  %v847 = vadd.f32 %v812, %v829
  %v848 = vadd.f32 %v813, %v829
  %v849 = vadd.f32 %v814, %v829
  %v850 = vadd.f32 %v815, %v829
  %v851 = vadd.f32 %v816, %v829
  %v852 = vadd.f32 %v817, %v829
  %v853 = vadd.f32 %v818, %v829
  %v854 = vadd.f32 %v819, %v829
  %v855 = vadd.f32 %v820, %v829
  %v856 = vadd.f32 %v821, %v829
  %v857 = vadd.f32 %v822, %v829
  %v858 = vadd.f32 %v823, %v829
  %v859 = vtanh.pop %v831
  %v860 = vtanh.pop %v832
  %v861 = vtanh.pop %v833
  %v862 = vtanh.pop %v834
  %v863 = vtanh.pop %v835
  %v864 = vtanh.pop %v836
  %v865 = vtanh.pop %v837
  %v866 = vtanh.pop %v838
  %v867 = vtanh.pop %v839
  %v868 = vtanh.pop %v840
  %v869 = vtanh.pop %v841
  %v870 = vtanh.pop %v842
  %v871 = vtanh.pop %v843
  %v872 = vtanh.pop %v844
  %v873 = vtanh.pop %v845
  %v874 = vtanh.pop %v846
  %v875 = vtanh.pop %v847
  %v876 = vtanh.pop %v848
  %v877 = vtanh.pop %v849
  %v878 = vtanh.pop %v850
  %v879 = vtanh.pop %v851
  %v880 = vtanh.pop %v852
  %v881 = vtanh.pop %v853
  %v882 = vtanh.pop %v854
  %v883 = vtanh.pop %v855
  %v884 = vtanh.pop %v856
  %v885 = vtanh.pop %v857
  %v886 = vtanh.pop %v858
  %v887 = vld [vmem:[%s3] sm:$0x1]
  %v888 = vlaneseq
  %v889 = vshrl.u32 %v888, 7
  %v890 = vsub.s32 0, %v889
  %v891 = vrot.slane %v887, %v890
  %v892 = vmul.f32 %v859, %v891
  %v893 = vmul.f32 %v860, %v891
  %v894 = vmul.f32 %v861, %v891
  %v895 = vmul.f32 %v862, %v891
  %v896 = vmul.f32 %v863, %v891
  %v897 = vmul.f32 %v864, %v891
  %v898 = vmul.f32 %v865, %v891
  %v899 = vmul.f32 %v866, %v891
  %v900 = vmul.f32 %v867, %v891
  %v901 = vmul.f32 %v868, %v891
  %v902 = vmul.f32 %v869, %v891
  %v903 = vmul.f32 %v870, %v891
  %v904 = vmul.f32 %v871, %v891
  %v905 = vmul.f32 %v872, %v891
  %v906 = vmul.f32 %v873, %v891
  %v907 = vmul.f32 %v874, %v891
  %v908 = vmul.f32 %v875, %v891
  %v909 = vmul.f32 %v876, %v891
  %v910 = vmul.f32 %v877, %v891
  %v911 = vmul.f32 %v878, %v891
  %v912 = vmul.f32 %v879, %v891
  %v913 = vmul.f32 %v880, %v891
  %v914 = vmul.f32 %v881, %v891
  %v915 = vmul.f32 %v882, %v891
  %v916 = vadd.f32 %v892, 0.0
  %v917 = vadd.f32 %v893, 0.0
  %v918 = vadd.f32 %v894, 0.0
  %v919 = vadd.f32 %v895, 0.0
  %v920 = vadd.f32 %v896, 0.0
  %v921 = vadd.f32 %v897, 0.0
  %v922 = vadd.f32 %v898, 0.0
  %v923 = vadd.f32 %v899, 0.0
  %v924 = vadd.f32 %v900, 0.0
  %v925 = vadd.f32 %v901, 0.0
  %v926 = vadd.f32 %v902, 0.0
  %v927 = vadd.f32 %v903, 0.0
  %v928 = vadd.f32 %v904, 0.0
  %v929 = vadd.f32 %v905, 0.0
  %v930 = vadd.f32 %v906, 0.0
  %v931 = vadd.f32 %v907, 0.0
  %v932 = vadd.f32 %v908, 0.0
  %v933 = vadd.f32 %v909, 0.0
  %v934 = vadd.f32 %v910, 0.0
  %v935 = vadd.f32 %v911, 0.0
  %v936 = vadd.f32 %v912, 0.0
  %v937 = vadd.f32 %v913, 0.0
  %v938 = vadd.f32 %v914, 0.0
  %v939 = vadd.f32 %v915, 0.0
  %v940 = vld [vmem:[%s3 + $0x1] sm:$0x1]
  %v941 = vlaneseq
  %v942 = vshrl.u32 %v941, 7
  %v943 = vsub.s32 0, %v942
  %v944 = vrot.slane %v940, %v943
  %v945 = vmul.f32 %v859, %v944
  %v946 = vmul.f32 %v860, %v944
  %v947 = vmul.f32 %v861, %v944
  %v948 = vmul.f32 %v862, %v944
  %v949 = vmul.f32 %v863, %v944
  %v950 = vmul.f32 %v864, %v944
  %v951 = vmul.f32 %v865, %v944
  %v952 = vmul.f32 %v866, %v944
  %v953 = vmul.f32 %v867, %v944
  %v954 = vmul.f32 %v868, %v944
  %v955 = vmul.f32 %v869, %v944
  %v956 = vmul.f32 %v870, %v944
  %v957 = vmul.f32 %v871, %v944
  %v958 = vmul.f32 %v872, %v944
  %v959 = vmul.f32 %v873, %v944
  %v960 = vmul.f32 %v874, %v944
  %v961 = vmul.f32 %v875, %v944
  %v962 = vmul.f32 %v876, %v944
  %v963 = vmul.f32 %v877, %v944
  %v964 = vmul.f32 %v878, %v944
  %v965 = vmul.f32 %v879, %v944
  %v966 = vmul.f32 %v880, %v944
  %v967 = vmul.f32 %v881, %v944
  %v968 = vmul.f32 %v882, %v944
  %vm993 = vcmask 1046528
  %v994 = vrot.slane %v945, 1
  %v995 = vrot.slane %v946, 1
  %v996 = vsel %vm993, %v994, %v995
  %v997 = vrot.slane %v947, 1
  %v998 = vrot.slane %v948, 1
  %v999 = vsel %vm993, %v997, %v998
  %v1000 = vrot.slane %v949, 1
  %v1001 = vrot.slane %v950, 1
  %v1002 = vsel %vm993, %v1000, %v1001
  %v1003 = vrot.slane %v951, 1
  %v1004 = vrot.slane %v952, 1
  %v1005 = vsel %vm993, %v1003, %v1004
  %v1006 = vrot.slane %v953, 1
  %v1007 = vrot.slane %v954, 1
  %v1008 = vsel %vm993, %v1006, %v1007
  %v1009 = vrot.slane %v955, 1
  %v1010 = vrot.slane %v956, 1
  %v1011 = vsel %vm993, %v1009, %v1010
  %v1012 = vrot.slane %v957, 1
  %v1013 = vrot.slane %v958, 1
  %v1014 = vsel %vm993, %v1012, %v1013
  %v1015 = vrot.slane %v959, 1
  %v1016 = vrot.slane %v960, 1
  %v1017 = vsel %vm993, %v1015, %v1016
  %v1018 = vrot.slane %v961, 1
  %v1019 = vrot.slane %v962, 1
  %v1020 = vsel %vm993, %v1018, %v1019
  %v1021 = vrot.slane %v963, 1
  %v1022 = vrot.slane %v964, 1
  %v1023 = vsel %vm993, %v1021, %v1022
  %v1024 = vrot.slane %v965, 1
  %v1025 = vrot.slane %v966, 1
  %v1026 = vsel %vm993, %v1024, %v1025
  %v1027 = vrot.slane %v967, 1
  %v1028 = vrot.slane %v968, 1
  %v1029 = vsel %vm993, %v1027, %v1028
  %v1054 = vadd.f32 %v916, %v996
  %v1055 = vadd.f32 %v917, %v995
  %v1056 = vadd.f32 %v918, %v999
  %v1057 = vadd.f32 %v919, %v998
  %v1058 = vadd.f32 %v920, %v1002
  %v1059 = vadd.f32 %v921, %v1001
  %v1060 = vadd.f32 %v922, %v1005
  %v1061 = vadd.f32 %v923, %v1004
  %v1062 = vadd.f32 %v924, %v1008
  %v1063 = vadd.f32 %v925, %v1007
  %v1064 = vadd.f32 %v926, %v1011
  %v1065 = vadd.f32 %v927, %v1010
  %v1066 = vadd.f32 %v928, %v1014
  %v1067 = vadd.f32 %v929, %v1013
  %v1068 = vadd.f32 %v930, %v1017
  %v1069 = vadd.f32 %v931, %v1016
  %v1070 = vadd.f32 %v932, %v1020
  %v1071 = vadd.f32 %v933, %v1019
  %v1072 = vadd.f32 %v934, %v1023
  %v1073 = vadd.f32 %v935, %v1022
  %v1074 = vadd.f32 %v936, %v1026
  %v1075 = vadd.f32 %v937, %v1025
  %v1076 = vadd.f32 %v938, %v1029
  %v1077 = vadd.f32 %v939, %v1028
  %v1078 = vld [vmem:[%s3 + $0x2] sm:$0x1]
  %v1079 = vlaneseq
  %v1080 = vshrl.u32 %v1079, 7
  %v1081 = vsub.s32 0, %v1080
  %v1082 = vrot.slane %v1078, %v1081
  %v1083 = vmul.f32 %v859, %v1082
  %v1084 = vmul.f32 %v860, %v1082
  %v1085 = vmul.f32 %v861, %v1082
  %v1086 = vmul.f32 %v862, %v1082
  %v1087 = vmul.f32 %v863, %v1082
  %v1088 = vmul.f32 %v864, %v1082
  %v1089 = vmul.f32 %v865, %v1082
  %v1090 = vmul.f32 %v866, %v1082
  %v1091 = vmul.f32 %v867, %v1082
  %v1092 = vmul.f32 %v868, %v1082
  %v1093 = vmul.f32 %v869, %v1082
  %v1094 = vmul.f32 %v870, %v1082
  %v1095 = vmul.f32 %v871, %v1082
  %v1096 = vmul.f32 %v872, %v1082
  %v1097 = vmul.f32 %v873, %v1082
  %v1098 = vmul.f32 %v874, %v1082
  %v1099 = vmul.f32 %v875, %v1082
  %v1100 = vmul.f32 %v876, %v1082
  %v1101 = vmul.f32 %v877, %v1082
  %v1102 = vmul.f32 %v878, %v1082
  %v1103 = vmul.f32 %v879, %v1082
  %v1104 = vmul.f32 %v880, %v1082
  %v1105 = vmul.f32 %v881, %v1082
  %v1106 = vmul.f32 %v882, %v1082
  %vm1131 = vcmask 1045504
  %v1132 = vrot.slane %v1083, 2
  %v1133 = vrot.slane %v1084, 2
  %v1134 = vsel %vm1131, %v1132, %v1133
  %v1135 = vrot.slane %v1085, 2
  %v1136 = vrot.slane %v1086, 2
  %v1137 = vsel %vm1131, %v1135, %v1136
  %v1138 = vrot.slane %v1087, 2
  %v1139 = vrot.slane %v1088, 2
  %v1140 = vsel %vm1131, %v1138, %v1139
  %v1141 = vrot.slane %v1089, 2
  %v1142 = vrot.slane %v1090, 2
  %v1143 = vsel %vm1131, %v1141, %v1142
  %v1144 = vrot.slane %v1091, 2
  %v1145 = vrot.slane %v1092, 2
  %v1146 = vsel %vm1131, %v1144, %v1145
  %v1147 = vrot.slane %v1093, 2
  %v1148 = vrot.slane %v1094, 2
  %v1149 = vsel %vm1131, %v1147, %v1148
  %v1150 = vrot.slane %v1095, 2
  %v1151 = vrot.slane %v1096, 2
  %v1152 = vsel %vm1131, %v1150, %v1151
  %v1153 = vrot.slane %v1097, 2
  %v1154 = vrot.slane %v1098, 2
  %v1155 = vsel %vm1131, %v1153, %v1154
  %v1156 = vrot.slane %v1099, 2
  %v1157 = vrot.slane %v1100, 2
  %v1158 = vsel %vm1131, %v1156, %v1157
  %v1159 = vrot.slane %v1101, 2
  %v1160 = vrot.slane %v1102, 2
  %v1161 = vsel %vm1131, %v1159, %v1160
  %v1162 = vrot.slane %v1103, 2
  %v1163 = vrot.slane %v1104, 2
  %v1164 = vsel %vm1131, %v1162, %v1163
  %v1165 = vrot.slane %v1105, 2
  %v1166 = vrot.slane %v1106, 2
  %v1167 = vsel %vm1131, %v1165, %v1166
  %v1192 = vadd.f32 %v1054, %v1134
  %v1193 = vadd.f32 %v1055, %v1133
  %v1194 = vadd.f32 %v1056, %v1137
  %v1195 = vadd.f32 %v1057, %v1136
  %v1196 = vadd.f32 %v1058, %v1140
  %v1197 = vadd.f32 %v1059, %v1139
  %v1198 = vadd.f32 %v1060, %v1143
  %v1199 = vadd.f32 %v1061, %v1142
  %v1200 = vadd.f32 %v1062, %v1146
  %v1201 = vadd.f32 %v1063, %v1145
  %v1202 = vadd.f32 %v1064, %v1149
  %v1203 = vadd.f32 %v1065, %v1148
  %v1204 = vadd.f32 %v1066, %v1152
  %v1205 = vadd.f32 %v1067, %v1151
  %v1206 = vadd.f32 %v1068, %v1155
  %v1207 = vadd.f32 %v1069, %v1154
  %v1208 = vadd.f32 %v1070, %v1158
  %v1209 = vadd.f32 %v1071, %v1157
  %v1210 = vadd.f32 %v1072, %v1161
  %v1211 = vadd.f32 %v1073, %v1160
  %v1212 = vadd.f32 %v1074, %v1164
  %v1213 = vadd.f32 %v1075, %v1163
  %v1214 = vadd.f32 %v1076, %v1167
  %v1215 = vadd.f32 %v1077, %v1166
  %v1216 = vld [vmem:[%s3 + $0x3] sm:$0x1]
  %v1217 = vlaneseq
  %v1218 = vshrl.u32 %v1217, 7
  %v1219 = vsub.s32 0, %v1218
  %v1220 = vrot.slane %v1216, %v1219
  %v1221 = vmul.f32 %v861, %v1220
  %v1222 = vmul.f32 %v862, %v1220
  %v1223 = vmul.f32 %v863, %v1220
  %v1224 = vmul.f32 %v864, %v1220
  %v1225 = vmul.f32 %v865, %v1220
  %v1226 = vmul.f32 %v866, %v1220
  %v1227 = vmul.f32 %v867, %v1220
  %v1228 = vmul.f32 %v868, %v1220
  %v1229 = vmul.f32 %v869, %v1220
  %v1230 = vmul.f32 %v870, %v1220
  %v1231 = vmul.f32 %v871, %v1220
  %v1232 = vmul.f32 %v872, %v1220
  %v1233 = vmul.f32 %v873, %v1220
  %v1234 = vmul.f32 %v874, %v1220
  %v1235 = vmul.f32 %v875, %v1220
  %v1236 = vmul.f32 %v876, %v1220
  %v1237 = vmul.f32 %v877, %v1220
  %v1238 = vmul.f32 %v878, %v1220
  %v1239 = vmul.f32 %v879, %v1220
  %v1240 = vmul.f32 %v880, %v1220
  %v1241 = vmul.f32 %v881, %v1220
  %v1242 = vmul.f32 %v882, %v1220
  %v1243 = vmul.f32 %v883, %v1220
  %v1244 = vmul.f32 %v884, %v1220
  %v1245 = vadd.f32 %v1192, %v1221
  %v1246 = vadd.f32 %v1193, %v1222
  %v1247 = vadd.f32 %v1194, %v1223
  %v1248 = vadd.f32 %v1195, %v1224
  %v1249 = vadd.f32 %v1196, %v1225
  %v1250 = vadd.f32 %v1197, %v1226
  %v1251 = vadd.f32 %v1198, %v1227
  %v1252 = vadd.f32 %v1199, %v1228
  %v1253 = vadd.f32 %v1200, %v1229
  %v1254 = vadd.f32 %v1201, %v1230
  %v1255 = vadd.f32 %v1202, %v1231
  %v1256 = vadd.f32 %v1203, %v1232
  %v1257 = vadd.f32 %v1204, %v1233
  %v1258 = vadd.f32 %v1205, %v1234
  %v1259 = vadd.f32 %v1206, %v1235
  %v1260 = vadd.f32 %v1207, %v1236
  %v1261 = vadd.f32 %v1208, %v1237
  %v1262 = vadd.f32 %v1209, %v1238
  %v1263 = vadd.f32 %v1210, %v1239
  %v1264 = vadd.f32 %v1211, %v1240
  %v1265 = vadd.f32 %v1212, %v1241
  %v1266 = vadd.f32 %v1213, %v1242
  %v1267 = vadd.f32 %v1214, %v1243
  %v1268 = vadd.f32 %v1215, %v1244
  %v1269 = vld [vmem:[%s3 + $0x4] sm:$0x1]
  %v1270 = vlaneseq
  %v1271 = vshrl.u32 %v1270, 7
  %v1272 = vsub.s32 0, %v1271
  %v1273 = vrot.slane %v1269, %v1272
  %v1274 = vmul.f32 %v861, %v1273
  %v1275 = vmul.f32 %v862, %v1273
  %v1276 = vmul.f32 %v863, %v1273
  %v1277 = vmul.f32 %v864, %v1273
  %v1278 = vmul.f32 %v865, %v1273
  %v1279 = vmul.f32 %v866, %v1273
  %v1280 = vmul.f32 %v867, %v1273
  %v1281 = vmul.f32 %v868, %v1273
  %v1282 = vmul.f32 %v869, %v1273
  %v1283 = vmul.f32 %v870, %v1273
  %v1284 = vmul.f32 %v871, %v1273
  %v1285 = vmul.f32 %v872, %v1273
  %v1286 = vmul.f32 %v873, %v1273
  %v1287 = vmul.f32 %v874, %v1273
  %v1288 = vmul.f32 %v875, %v1273
  %v1289 = vmul.f32 %v876, %v1273
  %v1290 = vmul.f32 %v877, %v1273
  %v1291 = vmul.f32 %v878, %v1273
  %v1292 = vmul.f32 %v879, %v1273
  %v1293 = vmul.f32 %v880, %v1273
  %v1294 = vmul.f32 %v881, %v1273
  %v1295 = vmul.f32 %v882, %v1273
  %v1296 = vmul.f32 %v883, %v1273
  %v1297 = vmul.f32 %v884, %v1273
  %v1322 = vrot.slane %v1274, 1
  %v1323 = vrot.slane %v1275, 1
  %v1324 = vsel %vm993, %v1322, %v1323
  %v1325 = vrot.slane %v1276, 1
  %v1326 = vrot.slane %v1277, 1
  %v1327 = vsel %vm993, %v1325, %v1326
  %v1328 = vrot.slane %v1278, 1
  %v1329 = vrot.slane %v1279, 1
  %v1330 = vsel %vm993, %v1328, %v1329
  %v1331 = vrot.slane %v1280, 1
  %v1332 = vrot.slane %v1281, 1
  %v1333 = vsel %vm993, %v1331, %v1332
  %v1334 = vrot.slane %v1282, 1
  %v1335 = vrot.slane %v1283, 1
  %v1336 = vsel %vm993, %v1334, %v1335
  %v1337 = vrot.slane %v1284, 1
  %v1338 = vrot.slane %v1285, 1
  %v1339 = vsel %vm993, %v1337, %v1338
  %v1340 = vrot.slane %v1286, 1
  %v1341 = vrot.slane %v1287, 1
  %v1342 = vsel %vm993, %v1340, %v1341
  %v1343 = vrot.slane %v1288, 1
  %v1344 = vrot.slane %v1289, 1
  %v1345 = vsel %vm993, %v1343, %v1344
  %v1346 = vrot.slane %v1290, 1
  %v1347 = vrot.slane %v1291, 1
  %v1348 = vsel %vm993, %v1346, %v1347
  %v1349 = vrot.slane %v1292, 1
  %v1350 = vrot.slane %v1293, 1
  %v1351 = vsel %vm993, %v1349, %v1350
  %v1352 = vrot.slane %v1294, 1
  %v1353 = vrot.slane %v1295, 1
  %v1354 = vsel %vm993, %v1352, %v1353
  %v1355 = vrot.slane %v1296, 1
  %v1356 = vrot.slane %v1297, 1
  %v1357 = vsel %vm993, %v1355, %v1356
  %v1382 = vadd.f32 %v1245, %v1324
  %v1383 = vadd.f32 %v1246, %v1323
  %v1384 = vadd.f32 %v1247, %v1327
  %v1385 = vadd.f32 %v1248, %v1326
  %v1386 = vadd.f32 %v1249, %v1330
  %v1387 = vadd.f32 %v1250, %v1329
  %v1388 = vadd.f32 %v1251, %v1333
  %v1389 = vadd.f32 %v1252, %v1332
  %v1390 = vadd.f32 %v1253, %v1336
  %v1391 = vadd.f32 %v1254, %v1335
  %v1392 = vadd.f32 %v1255, %v1339
  %v1393 = vadd.f32 %v1256, %v1338
  %v1394 = vadd.f32 %v1257, %v1342
  %v1395 = vadd.f32 %v1258, %v1341
  %v1396 = vadd.f32 %v1259, %v1345
  %v1397 = vadd.f32 %v1260, %v1344
  %v1398 = vadd.f32 %v1261, %v1348
  %v1399 = vadd.f32 %v1262, %v1347
  %v1400 = vadd.f32 %v1263, %v1351
  %v1401 = vadd.f32 %v1264, %v1350
  %v1402 = vadd.f32 %v1265, %v1354
  %v1403 = vadd.f32 %v1266, %v1353
  %v1404 = vadd.f32 %v1267, %v1357
  %v1405 = vadd.f32 %v1268, %v1356
  %v1406 = vld [vmem:[%s3 + $0x5] sm:$0x1]
  %v1407 = vlaneseq
  %v1408 = vshrl.u32 %v1407, 7
  %v1409 = vsub.s32 0, %v1408
  %v1410 = vrot.slane %v1406, %v1409
  %v1411 = vmul.f32 %v861, %v1410
  %v1412 = vmul.f32 %v862, %v1410
  %v1413 = vmul.f32 %v863, %v1410
  %v1414 = vmul.f32 %v864, %v1410
  %v1415 = vmul.f32 %v865, %v1410
  %v1416 = vmul.f32 %v866, %v1410
  %v1417 = vmul.f32 %v867, %v1410
  %v1418 = vmul.f32 %v868, %v1410
  %v1419 = vmul.f32 %v869, %v1410
  %v1420 = vmul.f32 %v870, %v1410
  %v1421 = vmul.f32 %v871, %v1410
  %v1422 = vmul.f32 %v872, %v1410
  %v1423 = vmul.f32 %v873, %v1410
  %v1424 = vmul.f32 %v874, %v1410
  %v1425 = vmul.f32 %v875, %v1410
  %v1426 = vmul.f32 %v876, %v1410
  %v1427 = vmul.f32 %v877, %v1410
  %v1428 = vmul.f32 %v878, %v1410
  %v1429 = vmul.f32 %v879, %v1410
  %v1430 = vmul.f32 %v880, %v1410
  %v1431 = vmul.f32 %v881, %v1410
  %v1432 = vmul.f32 %v882, %v1410
  %v1433 = vmul.f32 %v883, %v1410
  %v1434 = vmul.f32 %v884, %v1410
  %v1459 = vrot.slane %v1411, 2
  %v1460 = vrot.slane %v1412, 2
  %v1461 = vsel %vm1131, %v1459, %v1460
  %v1462 = vrot.slane %v1413, 2
  %v1463 = vrot.slane %v1414, 2
  %v1464 = vsel %vm1131, %v1462, %v1463
  %v1465 = vrot.slane %v1415, 2
  %v1466 = vrot.slane %v1416, 2
  %v1467 = vsel %vm1131, %v1465, %v1466
  %v1468 = vrot.slane %v1417, 2
  %v1469 = vrot.slane %v1418, 2
  %v1470 = vsel %vm1131, %v1468, %v1469
  %v1471 = vrot.slane %v1419, 2
  %v1472 = vrot.slane %v1420, 2
  %v1473 = vsel %vm1131, %v1471, %v1472
  %v1474 = vrot.slane %v1421, 2
  %v1475 = vrot.slane %v1422, 2
  %v1476 = vsel %vm1131, %v1474, %v1475
  %v1477 = vrot.slane %v1423, 2
  %v1478 = vrot.slane %v1424, 2
  %v1479 = vsel %vm1131, %v1477, %v1478
  %v1480 = vrot.slane %v1425, 2
  %v1481 = vrot.slane %v1426, 2
  %v1482 = vsel %vm1131, %v1480, %v1481
  %v1483 = vrot.slane %v1427, 2
  %v1484 = vrot.slane %v1428, 2
  %v1485 = vsel %vm1131, %v1483, %v1484
  %v1486 = vrot.slane %v1429, 2
  %v1487 = vrot.slane %v1430, 2
  %v1488 = vsel %vm1131, %v1486, %v1487
  %v1489 = vrot.slane %v1431, 2
  %v1490 = vrot.slane %v1432, 2
  %v1491 = vsel %vm1131, %v1489, %v1490
  %v1492 = vrot.slane %v1433, 2
  %v1493 = vrot.slane %v1434, 2
  %v1494 = vsel %vm1131, %v1492, %v1493
  %v1519 = vadd.f32 %v1382, %v1461
  %v1520 = vadd.f32 %v1383, %v1460
  %v1521 = vadd.f32 %v1384, %v1464
  %v1522 = vadd.f32 %v1385, %v1463
  %v1523 = vadd.f32 %v1386, %v1467
  %v1524 = vadd.f32 %v1387, %v1466
  %v1525 = vadd.f32 %v1388, %v1470
  %v1526 = vadd.f32 %v1389, %v1469
  %v1527 = vadd.f32 %v1390, %v1473
  %v1528 = vadd.f32 %v1391, %v1472
  %v1529 = vadd.f32 %v1392, %v1476
  %v1530 = vadd.f32 %v1393, %v1475
  %v1531 = vadd.f32 %v1394, %v1479
  %v1532 = vadd.f32 %v1395, %v1478
  %v1533 = vadd.f32 %v1396, %v1482
  %v1534 = vadd.f32 %v1397, %v1481
  %v1535 = vadd.f32 %v1398, %v1485
  %v1536 = vadd.f32 %v1399, %v1484
  %v1537 = vadd.f32 %v1400, %v1488
  %v1538 = vadd.f32 %v1401, %v1487
  %v1539 = vadd.f32 %v1402, %v1491
  %v1540 = vadd.f32 %v1403, %v1490
  %v1541 = vadd.f32 %v1404, %v1494
  %v1542 = vadd.f32 %v1405, %v1493
  %v1543 = vld [vmem:[%s3 + $0x6] sm:$0x1]
  %v1544 = vlaneseq
  %v1545 = vshrl.u32 %v1544, 7
  %v1546 = vsub.s32 0, %v1545
  %v1547 = vrot.slane %v1543, %v1546
  %v1548 = vmul.f32 %v863, %v1547
  %v1549 = vmul.f32 %v864, %v1547
  %v1550 = vmul.f32 %v865, %v1547
  %v1551 = vmul.f32 %v866, %v1547
  %v1552 = vmul.f32 %v867, %v1547
  %v1553 = vmul.f32 %v868, %v1547
  %v1554 = vmul.f32 %v869, %v1547
  %v1555 = vmul.f32 %v870, %v1547
  %v1556 = vmul.f32 %v871, %v1547
  %v1557 = vmul.f32 %v872, %v1547
  %v1558 = vmul.f32 %v873, %v1547
  %v1559 = vmul.f32 %v874, %v1547
  %v1560 = vmul.f32 %v875, %v1547
  %v1561 = vmul.f32 %v876, %v1547
  %v1562 = vmul.f32 %v877, %v1547
  %v1563 = vmul.f32 %v878, %v1547
  %v1564 = vmul.f32 %v879, %v1547
  %v1565 = vmul.f32 %v880, %v1547
  %v1566 = vmul.f32 %v881, %v1547
  %v1567 = vmul.f32 %v882, %v1547
  %v1568 = vmul.f32 %v883, %v1547
  %v1569 = vmul.f32 %v884, %v1547
  %v1570 = vmul.f32 %v885, %v1547
  %v1571 = vmul.f32 %v886, %v1547
  %v1572 = vadd.f32 %v1519, %v1548
  %v1573 = vadd.f32 %v1520, %v1549
  %v1574 = vadd.f32 %v1521, %v1550
  %v1575 = vadd.f32 %v1522, %v1551
  %v1576 = vadd.f32 %v1523, %v1552
  %v1577 = vadd.f32 %v1524, %v1553
  %v1578 = vadd.f32 %v1525, %v1554
  %v1579 = vadd.f32 %v1526, %v1555
  %v1580 = vadd.f32 %v1527, %v1556
  %v1581 = vadd.f32 %v1528, %v1557
  %v1582 = vadd.f32 %v1529, %v1558
  %v1583 = vadd.f32 %v1530, %v1559
  %v1584 = vadd.f32 %v1531, %v1560
  %v1585 = vadd.f32 %v1532, %v1561
  %v1586 = vadd.f32 %v1533, %v1562
  %v1587 = vadd.f32 %v1534, %v1563
  %v1588 = vadd.f32 %v1535, %v1564
  %v1589 = vadd.f32 %v1536, %v1565
  %v1590 = vadd.f32 %v1537, %v1566
  %v1591 = vadd.f32 %v1538, %v1567
  %v1592 = vadd.f32 %v1539, %v1568
  %v1593 = vadd.f32 %v1540, %v1569
  %v1594 = vadd.f32 %v1541, %v1570
  %v1595 = vadd.f32 %v1542, %v1571
  %v1596 = vld [vmem:[%s3 + $0x7] sm:$0x1]
  %v1597 = vlaneseq
  %v1598 = vshrl.u32 %v1597, 7
  %v1599 = vsub.s32 0, %v1598
  %v1600 = vrot.slane %v1596, %v1599
  %v1601 = vmul.f32 %v863, %v1600
  %v1602 = vmul.f32 %v864, %v1600
  %v1603 = vmul.f32 %v865, %v1600
  %v1604 = vmul.f32 %v866, %v1600
  %v1605 = vmul.f32 %v867, %v1600
  %v1606 = vmul.f32 %v868, %v1600
  %v1607 = vmul.f32 %v869, %v1600
  %v1608 = vmul.f32 %v870, %v1600
  %v1609 = vmul.f32 %v871, %v1600
  %v1610 = vmul.f32 %v872, %v1600
  %v1611 = vmul.f32 %v873, %v1600
  %v1612 = vmul.f32 %v874, %v1600
  %v1613 = vmul.f32 %v875, %v1600
  %v1614 = vmul.f32 %v876, %v1600
  %v1615 = vmul.f32 %v877, %v1600
  %v1616 = vmul.f32 %v878, %v1600
  %v1617 = vmul.f32 %v879, %v1600
  %v1618 = vmul.f32 %v880, %v1600
  %v1619 = vmul.f32 %v881, %v1600
  %v1620 = vmul.f32 %v882, %v1600
  %v1621 = vmul.f32 %v883, %v1600
  %v1622 = vmul.f32 %v884, %v1600
  %v1623 = vmul.f32 %v885, %v1600
  %v1624 = vmul.f32 %v886, %v1600
  %v1649 = vrot.slane %v1601, 1
  %v1650 = vrot.slane %v1602, 1
  %v1651 = vsel %vm993, %v1649, %v1650
  %v1652 = vrot.slane %v1603, 1
  %v1653 = vrot.slane %v1604, 1
  %v1654 = vsel %vm993, %v1652, %v1653
  %v1655 = vrot.slane %v1605, 1
  %v1656 = vrot.slane %v1606, 1
  %v1657 = vsel %vm993, %v1655, %v1656
  %v1658 = vrot.slane %v1607, 1
  %v1659 = vrot.slane %v1608, 1
  %v1660 = vsel %vm993, %v1658, %v1659
  %v1661 = vrot.slane %v1609, 1
  %v1662 = vrot.slane %v1610, 1
  %v1663 = vsel %vm993, %v1661, %v1662
  %v1664 = vrot.slane %v1611, 1
  %v1665 = vrot.slane %v1612, 1
  %v1666 = vsel %vm993, %v1664, %v1665
  %v1667 = vrot.slane %v1613, 1
  %v1668 = vrot.slane %v1614, 1
  %v1669 = vsel %vm993, %v1667, %v1668
  %v1670 = vrot.slane %v1615, 1
  %v1671 = vrot.slane %v1616, 1
  %v1672 = vsel %vm993, %v1670, %v1671
  %v1673 = vrot.slane %v1617, 1
  %v1674 = vrot.slane %v1618, 1
  %v1675 = vsel %vm993, %v1673, %v1674
  %v1676 = vrot.slane %v1619, 1
  %v1677 = vrot.slane %v1620, 1
  %v1678 = vsel %vm993, %v1676, %v1677
  %v1679 = vrot.slane %v1621, 1
  %v1680 = vrot.slane %v1622, 1
  %v1681 = vsel %vm993, %v1679, %v1680
  %v1682 = vrot.slane %v1623, 1
  %v1683 = vrot.slane %v1624, 1
  %v1684 = vsel %vm993, %v1682, %v1683
  %v1709 = vadd.f32 %v1572, %v1651
  %v1710 = vadd.f32 %v1573, %v1650
  %v1711 = vadd.f32 %v1574, %v1654
  %v1712 = vadd.f32 %v1575, %v1653
  %v1713 = vadd.f32 %v1576, %v1657
  %v1714 = vadd.f32 %v1577, %v1656
  %v1715 = vadd.f32 %v1578, %v1660
  %v1716 = vadd.f32 %v1579, %v1659
  %v1717 = vadd.f32 %v1580, %v1663
  %v1718 = vadd.f32 %v1581, %v1662
  %v1719 = vadd.f32 %v1582, %v1666
  %v1720 = vadd.f32 %v1583, %v1665
  %v1721 = vadd.f32 %v1584, %v1669
  %v1722 = vadd.f32 %v1585, %v1668
  %v1723 = vadd.f32 %v1586, %v1672
  %v1724 = vadd.f32 %v1587, %v1671
  %v1725 = vadd.f32 %v1588, %v1675
  %v1726 = vadd.f32 %v1589, %v1674
  %v1727 = vadd.f32 %v1590, %v1678
  %v1728 = vadd.f32 %v1591, %v1677
  %v1729 = vadd.f32 %v1592, %v1681
  %v1730 = vadd.f32 %v1593, %v1680
  %v1731 = vadd.f32 %v1594, %v1684
  %v1732 = vadd.f32 %v1595, %v1683
  %v1733 = vld [vmem:[%s3 + $0x8] sm:$0x1]
  %v1734 = vlaneseq
  %v1735 = vshrl.u32 %v1734, 7
  %v1736 = vsub.s32 0, %v1735
  %v1737 = vrot.slane %v1733, %v1736
  %v1738 = vmul.f32 %v863, %v1737
  %v1739 = vmul.f32 %v864, %v1737
  %v1740 = vmul.f32 %v865, %v1737
  %v1741 = vmul.f32 %v866, %v1737
  %v1742 = vmul.f32 %v867, %v1737
  %v1743 = vmul.f32 %v868, %v1737
  %v1744 = vmul.f32 %v869, %v1737
  %v1745 = vmul.f32 %v870, %v1737
  %v1746 = vmul.f32 %v871, %v1737
  %v1747 = vmul.f32 %v872, %v1737
  %v1748 = vmul.f32 %v873, %v1737
  %v1749 = vmul.f32 %v874, %v1737
  %v1750 = vmul.f32 %v875, %v1737
  %v1751 = vmul.f32 %v876, %v1737
  %v1752 = vmul.f32 %v877, %v1737
  %v1753 = vmul.f32 %v878, %v1737
  %v1754 = vmul.f32 %v879, %v1737
  %v1755 = vmul.f32 %v880, %v1737
  %v1756 = vmul.f32 %v881, %v1737
  %v1757 = vmul.f32 %v882, %v1737
  %v1758 = vmul.f32 %v883, %v1737
  %v1759 = vmul.f32 %v884, %v1737
  %v1760 = vmul.f32 %v885, %v1737
  %v1761 = vmul.f32 %v886, %v1737
  %v1786 = vrot.slane %v1738, 2
  %v1787 = vrot.slane %v1739, 2
  %v1788 = vsel %vm1131, %v1786, %v1787
  %v1789 = vrot.slane %v1740, 2
  %v1790 = vrot.slane %v1741, 2
  %v1791 = vsel %vm1131, %v1789, %v1790
  %v1792 = vrot.slane %v1742, 2
  %v1793 = vrot.slane %v1743, 2
  %v1794 = vsel %vm1131, %v1792, %v1793
  %v1795 = vrot.slane %v1744, 2
  %v1796 = vrot.slane %v1745, 2
  %v1797 = vsel %vm1131, %v1795, %v1796
  %v1798 = vrot.slane %v1746, 2
  %v1799 = vrot.slane %v1747, 2
  %v1800 = vsel %vm1131, %v1798, %v1799
  %v1801 = vrot.slane %v1748, 2
  %v1802 = vrot.slane %v1749, 2
  %v1803 = vsel %vm1131, %v1801, %v1802
  %v1804 = vrot.slane %v1750, 2
  %v1805 = vrot.slane %v1751, 2
  %v1806 = vsel %vm1131, %v1804, %v1805
  %v1807 = vrot.slane %v1752, 2
  %v1808 = vrot.slane %v1753, 2
  %v1809 = vsel %vm1131, %v1807, %v1808
  %v1810 = vrot.slane %v1754, 2
  %v1811 = vrot.slane %v1755, 2
  %v1812 = vsel %vm1131, %v1810, %v1811
  %v1813 = vrot.slane %v1756, 2
  %v1814 = vrot.slane %v1757, 2
  %v1815 = vsel %vm1131, %v1813, %v1814
  %v1816 = vrot.slane %v1758, 2
  %v1817 = vrot.slane %v1759, 2
  %v1818 = vsel %vm1131, %v1816, %v1817
  %v1819 = vrot.slane %v1760, 2
  %v1820 = vrot.slane %v1761, 2
  %v1821 = vsel %vm1131, %v1819, %v1820
  %v1846 = vadd.f32 %v1709, %v1788
  %v1847 = vadd.f32 %v1710, %v1787
  %v1848 = vadd.f32 %v1711, %v1791
  %v1849 = vadd.f32 %v1712, %v1790
  %v1850 = vadd.f32 %v1713, %v1794
  %v1851 = vadd.f32 %v1714, %v1793
  %v1852 = vadd.f32 %v1715, %v1797
  %v1853 = vadd.f32 %v1716, %v1796
  %v1854 = vadd.f32 %v1717, %v1800
  %v1855 = vadd.f32 %v1718, %v1799
  %v1856 = vadd.f32 %v1719, %v1803
  %v1857 = vadd.f32 %v1720, %v1802
  %v1858 = vadd.f32 %v1721, %v1806
  %v1859 = vadd.f32 %v1722, %v1805
  %v1860 = vadd.f32 %v1723, %v1809
  %v1861 = vadd.f32 %v1724, %v1808
  %v1862 = vadd.f32 %v1725, %v1812
  %v1863 = vadd.f32 %v1726, %v1811
  %v1864 = vadd.f32 %v1727, %v1815
  %v1865 = vadd.f32 %v1728, %v1814
  %v1866 = vadd.f32 %v1729, %v1818
  %v1867 = vadd.f32 %v1730, %v1817
  %v1868 = vadd.f32 %v1731, %v1821
  %v1869 = vadd.f32 %v1732, %v1820
  %s1870 = sld [smem:[#allocation2]]
  %vm1871 = vcmask 261120
  %v1872 = vsel %vm1871, %v1846, 0.0
  %1873 = vadd.xlane.f32.xlu0 %v1872
  %v1874 = vpop.xlane.xlu0 %1873
  %vm1875 = vcmask 257024
  %v1876 = vsel %vm1875, %v1847, 0.0
  %1877 = vadd.xlane.f32.xlu0 %v1876
  %v1878 = vpop.xlane.xlu0 %1877
  %v1879 = vsel %vm1871, %v1848, 0.0
  %1880 = vadd.xlane.f32.xlu0 %v1879
  %v1881 = vpop.xlane.xlu0 %1880
  %v1882 = vsel %vm1875, %v1849, 0.0
  %1883 = vadd.xlane.f32.xlu0 %v1882
  %v1884 = vpop.xlane.xlu0 %1883
  %v1885 = vsel %vm1871, %v1850, 0.0
  %1886 = vadd.xlane.f32.xlu0 %v1885
  %v1887 = vpop.xlane.xlu0 %1886
  %v1888 = vsel %vm1875, %v1851, 0.0
  %1889 = vadd.xlane.f32.xlu0 %v1888
  %v1890 = vpop.xlane.xlu0 %1889
  %v1891 = vsel %vm1871, %v1852, 0.0
  %1892 = vadd.xlane.f32.xlu0 %v1891
  %v1893 = vpop.xlane.xlu0 %1892
  %v1894 = vsel %vm1875, %v1853, 0.0
  %1895 = vadd.xlane.f32.xlu0 %v1894
  %v1896 = vpop.xlane.xlu0 %1895
  %v1897 = vsel %vm1871, %v1854, 0.0
  %1898 = vadd.xlane.f32.xlu0 %v1897
  %v1899 = vpop.xlane.xlu0 %1898
  %v1900 = vsel %vm1875, %v1855, 0.0
  %1901 = vadd.xlane.f32.xlu0 %v1900
  %v1902 = vpop.xlane.xlu0 %1901
  %v1903 = vsel %vm1871, %v1856, 0.0
  %1904 = vadd.xlane.f32.xlu0 %v1903
  %v1905 = vpop.xlane.xlu0 %1904
  %v1906 = vsel %vm1875, %v1857, 0.0
  %1907 = vadd.xlane.f32.xlu0 %v1906
  %v1908 = vpop.xlane.xlu0 %1907
  %v1909 = vsel %vm1871, %v1858, 0.0
  %1910 = vadd.xlane.f32.xlu0 %v1909
  %v1911 = vpop.xlane.xlu0 %1910
  %v1912 = vsel %vm1875, %v1859, 0.0
  %1913 = vadd.xlane.f32.xlu0 %v1912
  %v1914 = vpop.xlane.xlu0 %1913
  %v1915 = vsel %vm1871, %v1860, 0.0
  %1916 = vadd.xlane.f32.xlu0 %v1915
  %v1917 = vpop.xlane.xlu0 %1916
  %v1918 = vsel %vm1875, %v1861, 0.0
  %1919 = vadd.xlane.f32.xlu0 %v1918
  %v1920 = vpop.xlane.xlu0 %1919
  %v1921 = vsel %vm1871, %v1862, 0.0
  %1922 = vadd.xlane.f32.xlu0 %v1921
  %v1923 = vpop.xlane.xlu0 %1922
  %v1924 = vsel %vm1875, %v1863, 0.0
  %1925 = vadd.xlane.f32.xlu0 %v1924
  %v1926 = vpop.xlane.xlu0 %1925
  %v1927 = vsel %vm1871, %v1864, 0.0
  %1928 = vadd.xlane.f32.xlu0 %v1927
  %v1929 = vpop.xlane.xlu0 %1928
  %v1930 = vsel %vm1875, %v1865, 0.0
  %1931 = vadd.xlane.f32.xlu0 %v1930
  %v1932 = vpop.xlane.xlu0 %1931
  %v1933 = vsel %vm1871, %v1866, 0.0
  %1934 = vadd.xlane.f32.xlu0 %v1933
  %v1935 = vpop.xlane.xlu0 %1934
  %v1936 = vsel %vm1875, %v1867, 0.0
  %1937 = vadd.xlane.f32.xlu0 %v1936
  %v1938 = vpop.xlane.xlu0 %1937
  %v1939 = vsel %vm1871, %v1868, 0.0
  %1940 = vadd.xlane.f32.xlu0 %v1939
  %v1941 = vpop.xlane.xlu0 %1940
  %v1942 = vsel %vm1875, %v1869, 0.0
  %1943 = vadd.xlane.f32.xlu0 %v1942
  %v1944 = vpop.xlane.xlu0 %1943
  %v1945 = vstv %s1870
  %v1946 = vadd.f32 %v1874, %v1945
  %v1947 = vadd.f32 %v1878, %v1945
  %v1948 = vadd.f32 %v1881, %v1945
  %v1949 = vadd.f32 %v1884, %v1945
  %v1950 = vadd.f32 %v1887, %v1945
  %v1951 = vadd.f32 %v1890, %v1945
  %v1952 = vadd.f32 %v1893, %v1945
  %v1953 = vadd.f32 %v1896, %v1945
  %v1954 = vadd.f32 %v1899, %v1945
  %v1955 = vadd.f32 %v1902, %v1945
  %v1956 = vadd.f32 %v1905, %v1945
  %v1957 = vadd.f32 %v1908, %v1945
  %v1958 = vadd.f32 %v1911, %v1945
  %v1959 = vadd.f32 %v1914, %v1945
  %v1960 = vadd.f32 %v1917, %v1945
  %v1961 = vadd.f32 %v1920, %v1945
  %v1962 = vadd.f32 %v1923, %v1945
  %v1963 = vadd.f32 %v1926, %v1945
  %v1964 = vadd.f32 %v1929, %v1945
  %v1965 = vadd.f32 %v1932, %v1945
  %v1966 = vadd.f32 %v1935, %v1945
  %v1967 = vadd.f32 %v1938, %v1945
  %v1968 = vadd.f32 %v1941, %v1945
  %v1969 = vadd.f32 %v1944, %v1945
  %1994 = vrot.lane.b32.xlu0 %v1846, 96
  %v1995 = vpop.permute.xlu0 %1994
  %1996 = vrot.lane.b32.xlu0 %v1847, 96
  %v1997 = vpop.permute.xlu0 %1996
  %1998 = vrot.lane.b32.xlu0 %v1848, 96
  %v1999 = vpop.permute.xlu0 %1998
  %2000 = vrot.lane.b32.xlu0 %v1849, 96
  %v2001 = vpop.permute.xlu0 %2000
  %2002 = vrot.lane.b32.xlu0 %v1850, 96
  %v2003 = vpop.permute.xlu0 %2002
  %2004 = vrot.lane.b32.xlu0 %v1851, 96
  %v2005 = vpop.permute.xlu0 %2004
  %2006 = vrot.lane.b32.xlu0 %v1852, 96
  %v2007 = vpop.permute.xlu0 %2006
  %2008 = vrot.lane.b32.xlu0 %v1853, 96
  %v2009 = vpop.permute.xlu0 %2008
  %2010 = vrot.lane.b32.xlu0 %v1854, 96
  %v2011 = vpop.permute.xlu0 %2010
  %2012 = vrot.lane.b32.xlu0 %v1855, 96
  %v2013 = vpop.permute.xlu0 %2012
  %2014 = vrot.lane.b32.xlu0 %v1856, 96
  %v2015 = vpop.permute.xlu0 %2014
  %2016 = vrot.lane.b32.xlu0 %v1857, 96
  %v2017 = vpop.permute.xlu0 %2016
  %2018 = vrot.lane.b32.xlu0 %v1858, 96
  %v2019 = vpop.permute.xlu0 %2018
  %2020 = vrot.lane.b32.xlu0 %v1859, 96
  %v2021 = vpop.permute.xlu0 %2020
  %2022 = vrot.lane.b32.xlu0 %v1860, 96
  %v2023 = vpop.permute.xlu0 %2022
  %2024 = vrot.lane.b32.xlu0 %v1861, 96
  %v2025 = vpop.permute.xlu0 %2024
  %2026 = vrot.lane.b32.xlu0 %v1862, 96
  %v2027 = vpop.permute.xlu0 %2026
  %2028 = vrot.lane.b32.xlu0 %v1863, 96
  %v2029 = vpop.permute.xlu0 %2028
  %2030 = vrot.lane.b32.xlu0 %v1864, 96
  %v2031 = vpop.permute.xlu0 %2030
  %2032 = vrot.lane.b32.xlu0 %v1865, 96
  %v2033 = vpop.permute.xlu0 %2032
  %2034 = vrot.lane.b32.xlu0 %v1866, 96
  %v2035 = vpop.permute.xlu0 %2034
  %2036 = vrot.lane.b32.xlu0 %v1867, 96
  %v2037 = vpop.permute.xlu0 %2036
  %2038 = vrot.lane.b32.xlu0 %v1868, 96
  %v2039 = vpop.permute.xlu0 %2038
  %2040 = vrot.lane.b32.xlu0 %v1869, 96
  %v2041 = vpop.permute.xlu0 %2040
  %v2066 = vsel %vm1871, %v1995, 0.0
  %2067 = vadd.xlane.f32.xlu0 %v2066
  %v2068 = vpop.xlane.xlu0 %2067
  %v2069 = vsel %vm1875, %v1997, 0.0
  %2070 = vadd.xlane.f32.xlu0 %v2069
  %v2071 = vpop.xlane.xlu0 %2070
  %v2072 = vsel %vm1871, %v1999, 0.0
  %2073 = vadd.xlane.f32.xlu0 %v2072
  %v2074 = vpop.xlane.xlu0 %2073
  %v2075 = vsel %vm1875, %v2001, 0.0
  %2076 = vadd.xlane.f32.xlu0 %v2075
  %v2077 = vpop.xlane.xlu0 %2076
  %v2078 = vsel %vm1871, %v2003, 0.0
  %2079 = vadd.xlane.f32.xlu0 %v2078
  %v2080 = vpop.xlane.xlu0 %2079
  %v2081 = vsel %vm1875, %v2005, 0.0
  %2082 = vadd.xlane.f32.xlu0 %v2081
  %v2083 = vpop.xlane.xlu0 %2082
  %v2084 = vsel %vm1871, %v2007, 0.0
  %2085 = vadd.xlane.f32.xlu0 %v2084
  %v2086 = vpop.xlane.xlu0 %2085
  %v2087 = vsel %vm1875, %v2009, 0.0
  %2088 = vadd.xlane.f32.xlu0 %v2087
  %v2089 = vpop.xlane.xlu0 %2088
  %v2090 = vsel %vm1871, %v2011, 0.0
  %2091 = vadd.xlane.f32.xlu0 %v2090
  %v2092 = vpop.xlane.xlu0 %2091
  %v2093 = vsel %vm1875, %v2013, 0.0
  %2094 = vadd.xlane.f32.xlu0 %v2093
  %v2095 = vpop.xlane.xlu0 %2094
  %v2096 = vsel %vm1871, %v2015, 0.0
  %2097 = vadd.xlane.f32.xlu0 %v2096
  %v2098 = vpop.xlane.xlu0 %2097
  %v2099 = vsel %vm1875, %v2017, 0.0
  %2100 = vadd.xlane.f32.xlu0 %v2099
  %v2101 = vpop.xlane.xlu0 %2100
  %v2102 = vsel %vm1871, %v2019, 0.0
  %2103 = vadd.xlane.f32.xlu0 %v2102
  %v2104 = vpop.xlane.xlu0 %2103
  %v2105 = vsel %vm1875, %v2021, 0.0
  %2106 = vadd.xlane.f32.xlu0 %v2105
  %v2107 = vpop.xlane.xlu0 %2106
  %v2108 = vsel %vm1871, %v2023, 0.0
  %2109 = vadd.xlane.f32.xlu0 %v2108
  %v2110 = vpop.xlane.xlu0 %2109
  %v2111 = vsel %vm1875, %v2025, 0.0
  %2112 = vadd.xlane.f32.xlu0 %v2111
  %v2113 = vpop.xlane.xlu0 %2112
  %v2114 = vsel %vm1871, %v2027, 0.0
  %2115 = vadd.xlane.f32.xlu0 %v2114
  %v2116 = vpop.xlane.xlu0 %2115
  %v2117 = vsel %vm1875, %v2029, 0.0
  %2118 = vadd.xlane.f32.xlu0 %v2117
  %v2119 = vpop.xlane.xlu0 %2118
  %v2120 = vsel %vm1871, %v2031, 0.0
  %2121 = vadd.xlane.f32.xlu0 %v2120
  %v2122 = vpop.xlane.xlu0 %2121
  %v2123 = vsel %vm1875, %v2033, 0.0
  %2124 = vadd.xlane.f32.xlu0 %v2123
  %v2125 = vpop.xlane.xlu0 %2124
  %v2126 = vsel %vm1871, %v2035, 0.0
  %2127 = vadd.xlane.f32.xlu0 %v2126
  %v2128 = vpop.xlane.xlu0 %2127
  %v2129 = vsel %vm1875, %v2037, 0.0
  %2130 = vadd.xlane.f32.xlu0 %v2129
  %v2131 = vpop.xlane.xlu0 %2130
  %v2132 = vsel %vm1871, %v2039, 0.0
  %2133 = vadd.xlane.f32.xlu0 %v2132
  %v2134 = vpop.xlane.xlu0 %2133
  %v2135 = vsel %vm1875, %v2041, 0.0
  %2136 = vadd.xlane.f32.xlu0 %v2135
  %v2137 = vpop.xlane.xlu0 %2136
  %v2138 = vadd.f32 %v2068, %v1945
  %v2139 = vadd.f32 %v2071, %v1945
  %v2140 = vadd.f32 %v2074, %v1945
  %v2141 = vadd.f32 %v2077, %v1945
  %v2142 = vadd.f32 %v2080, %v1945
  %v2143 = vadd.f32 %v2083, %v1945
  %v2144 = vadd.f32 %v2086, %v1945
  %v2145 = vadd.f32 %v2089, %v1945
  %v2146 = vadd.f32 %v2092, %v1945
  %v2147 = vadd.f32 %v2095, %v1945
  %v2148 = vadd.f32 %v2098, %v1945
  %v2149 = vadd.f32 %v2101, %v1945
  %v2150 = vadd.f32 %v2104, %v1945
  %v2151 = vadd.f32 %v2107, %v1945
  %v2152 = vadd.f32 %v2110, %v1945
  %v2153 = vadd.f32 %v2113, %v1945
  %v2154 = vadd.f32 %v2116, %v1945
  %v2155 = vadd.f32 %v2119, %v1945
  %v2156 = vadd.f32 %v2122, %v1945
  %v2157 = vadd.f32 %v2125, %v1945
  %v2158 = vadd.f32 %v2128, %v1945
  %v2159 = vadd.f32 %v2131, %v1945
  %v2160 = vadd.f32 %v2134, %v1945
  %v2161 = vadd.f32 %v2137, %v1945
  %2210 = vset.pattern.permute.xlu0 0
  %2211 = vperm.xlu0 %2210, %v1946
  %v2212 = vpop.permute.xlu0 %2211
  %2213 = vset.pattern.permute.xlu0 0
  %2214 = vperm.xlu0 %2213, %v1947
  %v2215 = vpop.permute.xlu0 %2214
  %2216 = vset.pattern.permute.xlu0 0
  %2217 = vperm.xlu0 %2216, %v1948
  %v2218 = vpop.permute.xlu0 %2217
  %2219 = vset.pattern.permute.xlu0 0
  %2220 = vperm.xlu0 %2219, %v1949
  %v2221 = vpop.permute.xlu0 %2220
  %2222 = vset.pattern.permute.xlu0 0
  %2223 = vperm.xlu0 %2222, %v1950
  %v2224 = vpop.permute.xlu0 %2223
  %2225 = vset.pattern.permute.xlu0 0
  %2226 = vperm.xlu0 %2225, %v1951
  %v2227 = vpop.permute.xlu0 %2226
  %2228 = vset.pattern.permute.xlu0 0
  %2229 = vperm.xlu0 %2228, %v1952
  %v2230 = vpop.permute.xlu0 %2229
  %2231 = vset.pattern.permute.xlu0 0
  %2232 = vperm.xlu0 %2231, %v1953
  %v2233 = vpop.permute.xlu0 %2232
  %2234 = vset.pattern.permute.xlu0 0
  %2235 = vperm.xlu0 %2234, %v1954
  %v2236 = vpop.permute.xlu0 %2235
  %2237 = vset.pattern.permute.xlu0 0
  %2238 = vperm.xlu0 %2237, %v1955
  %v2239 = vpop.permute.xlu0 %2238
  %2240 = vset.pattern.permute.xlu0 0
  %2241 = vperm.xlu0 %2240, %v1956
  %v2242 = vpop.permute.xlu0 %2241
  %2243 = vset.pattern.permute.xlu0 0
  %2244 = vperm.xlu0 %2243, %v1957
  %v2245 = vpop.permute.xlu0 %2244
  %2246 = vset.pattern.permute.xlu0 0
  %2247 = vperm.xlu0 %2246, %v1958
  %v2248 = vpop.permute.xlu0 %2247
  %2249 = vset.pattern.permute.xlu0 0
  %2250 = vperm.xlu0 %2249, %v1959
  %v2251 = vpop.permute.xlu0 %2250
  %2252 = vset.pattern.permute.xlu0 0
  %2253 = vperm.xlu0 %2252, %v1960
  %v2254 = vpop.permute.xlu0 %2253
  %2255 = vset.pattern.permute.xlu0 0
  %2256 = vperm.xlu0 %2255, %v1961
  %v2257 = vpop.permute.xlu0 %2256
  %2258 = vset.pattern.permute.xlu0 0
  %2259 = vperm.xlu0 %2258, %v1962
  %v2260 = vpop.permute.xlu0 %2259
  %2261 = vset.pattern.permute.xlu0 0
  %2262 = vperm.xlu0 %2261, %v1963
  %v2263 = vpop.permute.xlu0 %2262
  %2264 = vset.pattern.permute.xlu0 0
  %2265 = vperm.xlu0 %2264, %v1964
  %v2266 = vpop.permute.xlu0 %2265
  %2267 = vset.pattern.permute.xlu0 0
  %2268 = vperm.xlu0 %2267, %v1965
  %v2269 = vpop.permute.xlu0 %2268
  %2270 = vset.pattern.permute.xlu0 0
  %2271 = vperm.xlu0 %2270, %v1966
  %v2272 = vpop.permute.xlu0 %2271
  %2273 = vset.pattern.permute.xlu0 0
  %2274 = vperm.xlu0 %2273, %v1967
  %v2275 = vpop.permute.xlu0 %2274
  %2276 = vset.pattern.permute.xlu0 0
  %2277 = vperm.xlu0 %2276, %v1968
  %v2278 = vpop.permute.xlu0 %2277
  %2279 = vset.pattern.permute.xlu0 0
  %2280 = vperm.xlu0 %2279, %v1969
  %v2281 = vpop.permute.xlu0 %2280
  %2282 = vset.pattern.permute.xlu0 0
  %2283 = vperm.xlu0 %2282, %v2138
  %v2284 = vpop.permute.xlu0 %2283
  %2285 = vset.pattern.permute.xlu0 0
  %2286 = vperm.xlu0 %2285, %v2139
  %v2287 = vpop.permute.xlu0 %2286
  %2288 = vset.pattern.permute.xlu0 0
  %2289 = vperm.xlu0 %2288, %v2140
  %v2290 = vpop.permute.xlu0 %2289
  %2291 = vset.pattern.permute.xlu0 0
  %2292 = vperm.xlu0 %2291, %v2141
  %v2293 = vpop.permute.xlu0 %2292
  %2294 = vset.pattern.permute.xlu0 0
  %2295 = vperm.xlu0 %2294, %v2142
  %v2296 = vpop.permute.xlu0 %2295
  %2297 = vset.pattern.permute.xlu0 0
  %2298 = vperm.xlu0 %2297, %v2143
  %v2299 = vpop.permute.xlu0 %2298
  %2300 = vset.pattern.permute.xlu0 0
  %2301 = vperm.xlu0 %2300, %v2144
  %v2302 = vpop.permute.xlu0 %2301
  %2303 = vset.pattern.permute.xlu0 0
  %2304 = vperm.xlu0 %2303, %v2145
  %v2305 = vpop.permute.xlu0 %2304
  %2306 = vset.pattern.permute.xlu0 0
  %2307 = vperm.xlu0 %2306, %v2146
  %v2308 = vpop.permute.xlu0 %2307
  %2309 = vset.pattern.permute.xlu0 0
  %2310 = vperm.xlu0 %2309, %v2147
  %v2311 = vpop.permute.xlu0 %2310
  %2312 = vset.pattern.permute.xlu0 0
  %2313 = vperm.xlu0 %2312, %v2148
  %v2314 = vpop.permute.xlu0 %2313
  %2315 = vset.pattern.permute.xlu0 0
  %2316 = vperm.xlu0 %2315, %v2149
  %v2317 = vpop.permute.xlu0 %2316
  %2318 = vset.pattern.permute.xlu0 0
  %2319 = vperm.xlu0 %2318, %v2150
  %v2320 = vpop.permute.xlu0 %2319
  %2321 = vset.pattern.permute.xlu0 0
  %2322 = vperm.xlu0 %2321, %v2151
  %v2323 = vpop.permute.xlu0 %2322
  %2324 = vset.pattern.permute.xlu0 0
  %2325 = vperm.xlu0 %2324, %v2152
  %v2326 = vpop.permute.xlu0 %2325
  %2327 = vset.pattern.permute.xlu0 0
  %2328 = vperm.xlu0 %2327, %v2153
  %v2329 = vpop.permute.xlu0 %2328
  %2330 = vset.pattern.permute.xlu0 0
  %2331 = vperm.xlu0 %2330, %v2154
  %v2332 = vpop.permute.xlu0 %2331
  %2333 = vset.pattern.permute.xlu0 0
  %2334 = vperm.xlu0 %2333, %v2155
  %v2335 = vpop.permute.xlu0 %2334
  %2336 = vset.pattern.permute.xlu0 0
  %2337 = vperm.xlu0 %2336, %v2156
  %v2338 = vpop.permute.xlu0 %2337
  %2339 = vset.pattern.permute.xlu0 0
  %2340 = vperm.xlu0 %2339, %v2157
  %v2341 = vpop.permute.xlu0 %2340
  %2342 = vset.pattern.permute.xlu0 0
  %2343 = vperm.xlu0 %2342, %v2158
  %v2344 = vpop.permute.xlu0 %2343
  %2345 = vset.pattern.permute.xlu0 0
  %2346 = vperm.xlu0 %2345, %v2159
  %v2347 = vpop.permute.xlu0 %2346
  %2348 = vset.pattern.permute.xlu0 0
  %2349 = vperm.xlu0 %2348, %v2160
  %v2350 = vpop.permute.xlu0 %2349
  %2351 = vset.pattern.permute.xlu0 0
  %2352 = vperm.xlu0 %2351, %v2161
  %v2353 = vpop.permute.xlu0 %2352
  %v2354 = vlaneseq
  %v2355 = vand.u32 %v2354, 127
  %v2356 = vlaneseq
  %v2357 = vshrl.u32 %v2356, 7
  %v2358 = vsub.s32 %v2355, %v2357
  %v2359 = vrot.slane %v2212, %v2358
  %v2360 = vadd.s32 %v2355, 4294967288
  %v2361 = vlaneseq
  %v2362 = vshrl.u32 %v2361, 7
  %v2363 = vsub.s32 %v2360, %v2362
  %v2364 = vrot.slane %v2215, %v2363
  %vm2365 = vcmask 130112
  %v2366 = vsel %vm2365, %v2364, %v2359
  %v2367 = vlaneseq
  %v2368 = vshrl.u32 %v2367, 7
  %v2369 = vsub.s32 %v2355, %v2368
  %v2370 = vrot.slane %v2218, %v2369
  %v2371 = vlaneseq
  %v2372 = vshrl.u32 %v2371, 7
  %v2373 = vsub.s32 %v2360, %v2372
  %v2374 = vrot.slane %v2221, %v2373
  %v2375 = vsel %vm2365, %v2374, %v2370
  %v2376 = vlaneseq
  %v2377 = vshrl.u32 %v2376, 7
  %v2378 = vsub.s32 %v2355, %v2377
  %v2379 = vrot.slane %v2224, %v2378
  %v2380 = vlaneseq
  %v2381 = vshrl.u32 %v2380, 7
  %v2382 = vsub.s32 %v2360, %v2381
  %v2383 = vrot.slane %v2227, %v2382
  %v2384 = vsel %vm2365, %v2383, %v2379
  %v2385 = vlaneseq
  %v2386 = vshrl.u32 %v2385, 7
  %v2387 = vsub.s32 %v2355, %v2386
  %v2388 = vrot.slane %v2230, %v2387
  %v2389 = vlaneseq
  %v2390 = vshrl.u32 %v2389, 7
  %v2391 = vsub.s32 %v2360, %v2390
  %v2392 = vrot.slane %v2233, %v2391
  %v2393 = vsel %vm2365, %v2392, %v2388
  %v2394 = vlaneseq
  %v2395 = vshrl.u32 %v2394, 7
  %v2396 = vsub.s32 %v2355, %v2395
  %v2397 = vrot.slane %v2236, %v2396
  %v2398 = vlaneseq
  %v2399 = vshrl.u32 %v2398, 7
  %v2400 = vsub.s32 %v2360, %v2399
  %v2401 = vrot.slane %v2239, %v2400
  %v2402 = vsel %vm2365, %v2401, %v2397
  %v2403 = vlaneseq
  %v2404 = vshrl.u32 %v2403, 7
  %v2405 = vsub.s32 %v2355, %v2404
  %v2406 = vrot.slane %v2242, %v2405
  %v2407 = vlaneseq
  %v2408 = vshrl.u32 %v2407, 7
  %v2409 = vsub.s32 %v2360, %v2408
  %v2410 = vrot.slane %v2245, %v2409
  %v2411 = vsel %vm2365, %v2410, %v2406
  %v2412 = vlaneseq
  %v2413 = vshrl.u32 %v2412, 7
  %v2414 = vsub.s32 %v2355, %v2413
  %v2415 = vrot.slane %v2248, %v2414
  %v2416 = vlaneseq
  %v2417 = vshrl.u32 %v2416, 7
  %v2418 = vsub.s32 %v2360, %v2417
  %v2419 = vrot.slane %v2251, %v2418
  %v2420 = vsel %vm2365, %v2419, %v2415
  %v2421 = vlaneseq
  %v2422 = vshrl.u32 %v2421, 7
  %v2423 = vsub.s32 %v2355, %v2422
  %v2424 = vrot.slane %v2254, %v2423
  %v2425 = vlaneseq
  %v2426 = vshrl.u32 %v2425, 7
  %v2427 = vsub.s32 %v2360, %v2426
  %v2428 = vrot.slane %v2257, %v2427
  %v2429 = vsel %vm2365, %v2428, %v2424
  %v2430 = vlaneseq
  %v2431 = vshrl.u32 %v2430, 7
  %v2432 = vsub.s32 %v2355, %v2431
  %v2433 = vrot.slane %v2260, %v2432
  %v2434 = vlaneseq
  %v2435 = vshrl.u32 %v2434, 7
  %v2436 = vsub.s32 %v2360, %v2435
  %v2437 = vrot.slane %v2263, %v2436
  %v2438 = vsel %vm2365, %v2437, %v2433
  %v2439 = vlaneseq
  %v2440 = vshrl.u32 %v2439, 7
  %v2441 = vsub.s32 %v2355, %v2440
  %v2442 = vrot.slane %v2266, %v2441
  %v2443 = vlaneseq
  %v2444 = vshrl.u32 %v2443, 7
  %v2445 = vsub.s32 %v2360, %v2444
  %v2446 = vrot.slane %v2269, %v2445
  %v2447 = vsel %vm2365, %v2446, %v2442
  %v2448 = vlaneseq
  %v2449 = vshrl.u32 %v2448, 7
  %v2450 = vsub.s32 %v2355, %v2449
  %v2451 = vrot.slane %v2272, %v2450
  %v2452 = vlaneseq
  %v2453 = vshrl.u32 %v2452, 7
  %v2454 = vsub.s32 %v2360, %v2453
  %v2455 = vrot.slane %v2275, %v2454
  %v2456 = vsel %vm2365, %v2455, %v2451
  %v2457 = vlaneseq
  %v2458 = vshrl.u32 %v2457, 7
  %v2459 = vsub.s32 %v2355, %v2458
  %v2460 = vrot.slane %v2278, %v2459
  %v2461 = vlaneseq
  %v2462 = vshrl.u32 %v2461, 7
  %v2463 = vsub.s32 %v2360, %v2462
  %v2464 = vrot.slane %v2281, %v2463
  %v2465 = vsel %vm2365, %v2464, %v2460
  %v2466 = vlaneseq
  %v2467 = vshrl.u32 %v2466, 7
  %v2468 = vsub.s32 %v2355, %v2467
  %v2469 = vrot.slane %v2284, %v2468
  %v2470 = vlaneseq
  %v2471 = vshrl.u32 %v2470, 7
  %v2472 = vsub.s32 %v2360, %v2471
  %v2473 = vrot.slane %v2287, %v2472
  %v2474 = vsel %vm2365, %v2473, %v2469
  %v2475 = vlaneseq
  %v2476 = vshrl.u32 %v2475, 7
  %v2477 = vsub.s32 %v2355, %v2476
  %v2478 = vrot.slane %v2290, %v2477
  %v2479 = vlaneseq
  %v2480 = vshrl.u32 %v2479, 7
  %v2481 = vsub.s32 %v2360, %v2480
  %v2482 = vrot.slane %v2293, %v2481
  %v2483 = vsel %vm2365, %v2482, %v2478
  %v2484 = vlaneseq
  %v2485 = vshrl.u32 %v2484, 7
  %v2486 = vsub.s32 %v2355, %v2485
  %v2487 = vrot.slane %v2296, %v2486
  %v2488 = vlaneseq
  %v2489 = vshrl.u32 %v2488, 7
  %v2490 = vsub.s32 %v2360, %v2489
  %v2491 = vrot.slane %v2299, %v2490
  %v2492 = vsel %vm2365, %v2491, %v2487
  %v2493 = vlaneseq
  %v2494 = vshrl.u32 %v2493, 7
  %v2495 = vsub.s32 %v2355, %v2494
  %v2496 = vrot.slane %v2302, %v2495
  %v2497 = vlaneseq
  %v2498 = vshrl.u32 %v2497, 7
  %v2499 = vsub.s32 %v2360, %v2498
  %v2500 = vrot.slane %v2305, %v2499
  %v2501 = vsel %vm2365, %v2500, %v2496
  %v2502 = vlaneseq
  %v2503 = vshrl.u32 %v2502, 7
  %v2504 = vsub.s32 %v2355, %v2503
  %v2505 = vrot.slane %v2308, %v2504
  %v2506 = vlaneseq
  %v2507 = vshrl.u32 %v2506, 7
  %v2508 = vsub.s32 %v2360, %v2507
  %v2509 = vrot.slane %v2311, %v2508
  %v2510 = vsel %vm2365, %v2509, %v2505
  %v2511 = vlaneseq
  %v2512 = vshrl.u32 %v2511, 7
  %v2513 = vsub.s32 %v2355, %v2512
  %v2514 = vrot.slane %v2314, %v2513
  %v2515 = vlaneseq
  %v2516 = vshrl.u32 %v2515, 7
  %v2517 = vsub.s32 %v2360, %v2516
  %v2518 = vrot.slane %v2317, %v2517
  %v2519 = vsel %vm2365, %v2518, %v2514
  %v2520 = vlaneseq
  %v2521 = vshrl.u32 %v2520, 7
  %v2522 = vsub.s32 %v2355, %v2521
  %v2523 = vrot.slane %v2320, %v2522
  %v2524 = vlaneseq
  %v2525 = vshrl.u32 %v2524, 7
  %v2526 = vsub.s32 %v2360, %v2525
  %v2527 = vrot.slane %v2323, %v2526
  %v2528 = vsel %vm2365, %v2527, %v2523
  %v2529 = vlaneseq
  %v2530 = vshrl.u32 %v2529, 7
  %v2531 = vsub.s32 %v2355, %v2530
  %v2532 = vrot.slane %v2326, %v2531
  %v2533 = vlaneseq
  %v2534 = vshrl.u32 %v2533, 7
  %v2535 = vsub.s32 %v2360, %v2534
  %v2536 = vrot.slane %v2329, %v2535
  %v2537 = vsel %vm2365, %v2536, %v2532
  %v2538 = vlaneseq
  %v2539 = vshrl.u32 %v2538, 7
  %v2540 = vsub.s32 %v2355, %v2539
  %v2541 = vrot.slane %v2332, %v2540
  %v2542 = vlaneseq
  %v2543 = vshrl.u32 %v2542, 7
  %v2544 = vsub.s32 %v2360, %v2543
  %v2545 = vrot.slane %v2335, %v2544
  %v2546 = vsel %vm2365, %v2545, %v2541
  %v2547 = vlaneseq
  %v2548 = vshrl.u32 %v2547, 7
  %v2549 = vsub.s32 %v2355, %v2548
  %v2550 = vrot.slane %v2338, %v2549
  %v2551 = vlaneseq
  %v2552 = vshrl.u32 %v2551, 7
  %v2553 = vsub.s32 %v2360, %v2552
  %v2554 = vrot.slane %v2341, %v2553
  %v2555 = vsel %vm2365, %v2554, %v2550
  %v2556 = vlaneseq
  %v2557 = vshrl.u32 %v2556, 7
  %v2558 = vsub.s32 %v2355, %v2557
  %v2559 = vrot.slane %v2344, %v2558
  %v2560 = vlaneseq
  %v2561 = vshrl.u32 %v2560, 7
  %v2562 = vsub.s32 %v2360, %v2561
  %v2563 = vrot.slane %v2347, %v2562
  %v2564 = vsel %vm2365, %v2563, %v2559
  %v2565 = vlaneseq
  %v2566 = vshrl.u32 %v2565, 7
  %v2567 = vsub.s32 %v2355, %v2566
  %v2568 = vrot.slane %v2350, %v2567
  %v2569 = vlaneseq
  %v2570 = vshrl.u32 %v2569, 7
  %v2571 = vsub.s32 %v2360, %v2570
  %v2572 = vrot.slane %v2353, %v2571
  %v2573 = vsel %vm2365, %v2572, %v2568
  %vm2574 = vcmask 1041409
  %v2575 = vsel %vm2574, %v2375, %v2366
  %vm2576 = vcmask 1042434
  %v2577 = vsel %vm2576, %v2384, %v2575
  %vm2578 = vcmask 1043459
  %v2579 = vsel %vm2578, %v2393, %v2577
  %vm2580 = vcmask 1044484
  %v2581 = vsel %vm2580, %v2402, %v2579
  %vm2582 = vcmask 1045509
  %v2583 = vsel %vm2582, %v2411, %v2581
  %vm2584 = vcmask 1046534
  %v2585 = vsel %vm2584, %v2420, %v2583
  %vm2586 = vcmask 1047559
  %v2587 = vsel %vm2586, %v2429, %v2585
  %v2588 = vsel %vm2574, %v2447, %v2438
  %v2589 = vsel %vm2576, %v2456, %v2588
  %v2590 = vsel %vm2578, %v2465, %v2589
  %v2591 = vsel %vm2574, %v2483, %v2474
  %v2592 = vsel %vm2576, %v2492, %v2591
  %v2593 = vsel %vm2578, %v2501, %v2592
  %v2594 = vsel %vm2580, %v2510, %v2593
  %v2595 = vsel %vm2582, %v2519, %v2594
  %v2596 = vsel %vm2584, %v2528, %v2595
  %v2597 = vsel %vm2586, %v2537, %v2596
  %v2598 = vsel %vm2574, %v2555, %v2546
  %v2599 = vsel %vm2576, %v2564, %v2598
  %v2600 = vsel %vm2578, %v2573, %v2599
  %vm2605 = vcmask 97280
  %2606 = vst.msk [vmem:[%s5] sm:$0xff] %vm2605, %v2587
  %vm2607 = vcmask 93184
  %2608 = vst.msk [vmem:[%s5 + $0x8] sm:$0xf] %vm2607, %v2590
  %2609 = vst.msk [vmem:[%s5 + $0x10] sm:$0xff] %vm2605, %v2597
  %2610 = vst.msk [vmem:[%s5 + $0x18] sm:$0xf] %vm2607, %v2600
  // Predicated region
  $region22: #{cnn_window_forward.1} parent=0 // pred_check
    _
  $region23: #{cnn_window_forward.1} parent=0 // pred_check_branch
    %2612 = sbr.rel (0) target = $region25
  $region24: #{cnn_window_forward.1} parent=0 // pred_region
    _
  $region25: #{cnn_window_forward.1} parent=0 // pred_fallthru
    _
  // Predicated region
  $region26: #{cnn_window_forward.1} parent=0 // pred_check
    _
  $region27: #{cnn_window_forward.1} parent=0 // pred_check_branch
    %2614 = sbr.rel (0) target = $region29
  $region28: #{cnn_window_forward.1} parent=0 // pred_region
    _
  $region29: #{cnn_window_forward.1} parent=0 // pred_fallthru
    _

</llo_original>
